<compile_context>
chip_gen: v5e
topology: v5e:2x2
jax: 0.10.0
libtpu: 0.0.40
codegen_flags: <defaults>
</compile_context>

<pallas_src>
import functools
import math

import jax
import jax.numpy as jnp
from jax import lax
from jax.experimental import pallas as pl
from jax.experimental.pallas import tpu as pltpu

_LN_EPS = 1e-5
_NEG_INF = -1e30
_INV_SQRT2 = 0.7071067811865476


def _round_up(a, b):
    return ((a + b - 1) // b) * b


def _vmem_cap_bytes():
    """Physical VMEM of the local TPU generation (conservative fallback)."""
    try:
        info = pltpu.get_tpu_info()
        cap = getattr(info, "vmem_capacity_bytes", None)
        if cap:
            return int(cap)
    except Exception:
        pass
    return 64 << 20  # v7x-sized fallback (smallest of v5e/v6e/v7x)


def _resident_spec(shape, index_map):
    """BlockSpec for a grid-invariant operand: single VMEM buffer if supported."""
    try:
        return pl.BlockSpec(shape, index_map, pipeline_mode=pl.Buffered(buffer_count=1))
    except (TypeError, AttributeError):
        return pl.BlockSpec(shape, index_map)


def _layer_norm_f32(x, gamma_2d, beta_2d):
    """LayerNorm over the last dim in f32. gamma/beta are (1, C)."""
    xf = x.astype(jnp.float32)
    mean = jnp.mean(xf, axis=-1, keepdims=True)
    var = jnp.mean((xf - mean) ** 2, axis=-1, keepdims=True)
    xn = (xf - mean) * lax.rsqrt(var + _LN_EPS)
    return xn * gamma_2d.astype(jnp.float32) + beta_2d.astype(jnp.float32)


# --------------------------------------------------------------------------
# Kernel 1: residual + causal multi-head self-attention on LN1(x)
# --------------------------------------------------------------------------
def _attn_block_kernel(x_ref, g1_ref, be1_ref, wqkv_ref, wo_ref, bo_ref,
                       o_ref, *, n_heads, head_size):
    # x_ref: (1, T, C); wqkv: (C, 3C) [Q|K|V, Q pre-scaled]; wo: (C, C); bo/g1/be1: (1, C)
    x = x_ref[0]                                    # (T, C)
    T, C = x.shape
    xf = x.astype(jnp.float32)

    xn = _layer_norm_f32(x, g1_ref[...], be1_ref[...])      # (T, C) f32
    cd = wqkv_ref.dtype                                      # MXU compute dtype (bf16)

    # Single lane-dense fused QKV projection: (T, C) @ (C, 3C), f32 accumulate.
    qkv = jnp.dot(xn.astype(cd), wqkv_ref[...],
                  preferred_element_type=jnp.float32)        # (T, 3C) f32

    row = lax.broadcasted_iota(jnp.int32, (T, T), 0)
    col = lax.broadcasted_iota(jnp.int32, (T, T), 1)
    causal = col <= row

    head_outs = []
    for h in range(n_heads):                                 # static unroll
        lo = h * head_size
        q = qkv[:, lo:lo + head_size].astype(cd)             # scale already folded in
        k = qkv[:, C + lo:C + lo + head_size].astype(cd)
        v = qkv[:, 2 * C + lo:2 * C + lo + head_size].astype(cd)

        s = lax.dot_general(q, k, (((1,), (1,)), ((), ())),
                            preferred_element_type=jnp.float32)   # (T, T) f32
        s = jnp.where(causal, s, _NEG_INF)
        p = jnp.exp(s - jnp.max(s, axis=-1, keepdims=True))
        p = p * pl.reciprocal(jnp.sum(p, axis=-1, keepdims=True), approx=True)

        head_outs.append(jnp.dot(p.astype(cd), v,
                                 preferred_element_type=jnp.float32))  # (T, hs)

    # Lane-contiguous (T, C) slab of all heads -> single K=C output projection.
    att = jnp.concatenate(head_outs, axis=-1).astype(cd)     # (T, C)
    proj = jnp.dot(att, wo_ref[...], preferred_element_type=jnp.float32)
    out = proj + bo_ref[...].astype(jnp.float32)
    o_ref[0] = (xf + out).astype(o_ref.dtype)


def _attention_block(x, g1, be1, wqkv, wo, bo, *, n_heads):
    B, T, C = x.shape
    head_size = C // n_heads
    kernel = functools.partial(_attn_block_kernel,
                               n_heads=n_heads, head_size=head_size)

    x_item = jnp.dtype(x.dtype).itemsize
    w_item = jnp.dtype(wqkv.dtype).itemsize
    cap = int(0.8 * _vmem_cap_bytes())
    # Working set per grid step: dbl-buffered x/out tiles, resident fused
    # weights (counted at 2 bufs to stay conservative), f32 intermediates.
    need = (4 * T * C * x_item                     # x + out tiles, double buffered
            + 2 * 4 * C * C * w_item               # wqkv (3C^2) + wo (C^2)
            + (1 + 3 + 1 + 1) * T * C * 4          # xn, qkv, att slab, acc (f32)
            + 2 * T * T * 4                        # scores + probs (f32)
            + (1 << 20))
    vmem_limit = int(min(max(need + (8 << 20), 32 << 20), cap))

    cost = pl.CostEstimate(
        flops=int(B * (8 * T * C * C + 4 * T * T * C)),
        transcendentals=int(B * n_heads * T * T),
        bytes_accessed=int(2 * B * T * C * x_item + 4 * C * C * w_item))

    return pl.pallas_call(
        kernel,
        out_shape=jax.ShapeDtypeStruct((B, T, C), x.dtype),
        grid_spec=pltpu.PrefetchScalarGridSpec(
            num_scalar_prefetch=0,
            grid=(B,),
            in_specs=[
                pl.BlockSpec((1, T, C), lambda b: (b, 0, 0)),         # x tile
                _resident_spec((1, C), lambda b: (0, 0)),             # ln1 gamma
                _resident_spec((1, C), lambda b: (0, 0)),             # ln1 beta
                _resident_spec((C, 3 * C), lambda b: (0, 0)),         # fused Wqkv
                _resident_spec((C, C), lambda b: (0, 0)),             # Wo
                _resident_spec((1, C), lambda b: (0, 0)),             # bo
            ],
            out_specs=pl.BlockSpec((1, T, C), lambda b: (b, 0, 0)),
        ),
        compiler_params=pltpu.CompilerParams(
            dimension_semantics=("parallel",),
            vmem_limit_bytes=vmem_limit),
        cost_estimate=cost,
    )(x, g1.reshape(1, C), be1.reshape(1, C), wqkv, wo, bo.reshape(1, C))


# --------------------------------------------------------------------------
# Kernel 2: residual + FeedForward (Linear -> GELU -> Linear) on LN2(x)
# --------------------------------------------------------------------------
def _ffn_block_kernel(x_ref, g2_ref, be2_ref, w1_ref, b1_ref, w2_ref, b2_ref,
                      o_ref, *, hidden_chunk):
    # x_ref: (tm, C); w1: (C, H); w2: (H, C); biases/gamma/beta are (1, *)
    x = x_ref[...]
    xf = x.astype(jnp.float32)
    C = x.shape[1]
    H = w1_ref.shape[1]

    xn = _layer_norm_f32(x, g2_ref[...], be2_ref[...])          # (tm, C) f32
    xn_mm = xn.astype(w1_ref.dtype)

    y = jnp.zeros((x.shape[0], C), jnp.float32)
    for c0 in range(0, H, hidden_chunk):                        # static unroll
        hc = hidden_chunk
        h = jnp.dot(xn_mm, w1_ref[:, c0:c0 + hc],
                    preferred_element_type=jnp.float32)         # (tm, hc) f32
        h = h + b1_ref[:, c0:c0 + hc].astype(jnp.float32)
        # Exact GELU (torch.nn.GELU() default, erf-based)
        h = 0.5 * h * (1.0 + lax.erf(h * jnp.float32(_INV_SQRT2)))
        y = y + jnp.dot(h.astype(w2_ref.dtype), w2_ref[c0:c0 + hc, :],
                        preferred_element_type=jnp.float32)     # (tm, C) f32

    y = y + b2_ref[...].astype(jnp.float32)
    o_ref[...] = (xf + y).astype(o_ref.dtype)


def _pick_hidden_chunk(H, max_chunk=1024):
    hc = H
    while hc > max_chunk and hc % 2 == 0:
        hc //= 2
    return hc


def _ffn_block(x2d, g2, be2, w1, b1, w2, b2):
    m, C = x2d.shape
    H = w1.shape[1]
    hc = _pick_hidden_chunk(H)

    x_item = jnp.dtype(x2d.dtype).itemsize
    w_item = jnp.dtype(w1.dtype).itemsize
    cap = int(0.8 * _vmem_cap_bytes())

    def _need(t):
        return (2 * (C * H + H * C) * w_item       # resident W1/W2 (<=2 bufs)
                + 4 * t * C * x_item               # dbl-buffered x/out row tiles
                + (2 * C + hc) * t * 4             # xn, y acc, hidden chunk (f32)
                + (2 * H + 4 * C) * 4)             # biases / LN params

    # Large row tile to keep the MXU / HBM pipe fed; shrink to fit the budget.
    tm = min(512, _round_up(m, 8))
    while _need(tm) + (4 << 20) > cap and tm > 64:
        tm //= 2
    grid = (pl.cdiv(m, tm),)
    vmem_limit = int(min(max(_need(tm) + (8 << 20), 32 << 20), cap))

    cost = pl.CostEstimate(
        flops=int(4 * m * C * H),
        transcendentals=int(m * H),
        bytes_accessed=int(2 * m * C * x_item + 2 * C * H * w_item))

    kernel = functools.partial(_ffn_block_kernel, hidden_chunk=hc)
    return pl.pallas_call(
        kernel,
        out_shape=jax.ShapeDtypeStruct((m, C), x2d.dtype),
        grid_spec=pltpu.PrefetchScalarGridSpec(
            num_scalar_prefetch=0,
            grid=grid,
            in_specs=[
                pl.BlockSpec((tm, C), lambda i: (i, 0)),        # x row tile
                _resident_spec((1, C), lambda i: (0, 0)),       # ln2 gamma
                _resident_spec((1, C), lambda i: (0, 0)),       # ln2 beta
                _resident_spec((C, H), lambda i: (0, 0)),       # W1 (resident)
                _resident_spec((1, H), lambda i: (0, 0)),       # b1
                _resident_spec((H, C), lambda i: (0, 0)),       # W2 (resident)
                _resident_spec((1, C), lambda i: (0, 0)),       # b2
            ],
            out_specs=pl.BlockSpec((tm, C), lambda i: (i, 0)),
        ),
        compiler_params=pltpu.CompilerParams(
            dimension_semantics=("parallel",),
            vmem_limit_bytes=vmem_limit),
        cost_estimate=cost,
    )(x2d, g2.reshape(1, C), be2.reshape(1, C), w1, b1.reshape(1, H),
      w2, b2.reshape(1, C))


# --------------------------------------------------------------------------
# Parameter preparation + full Block forward
# --------------------------------------------------------------------------
def prepare_block_params(params, *, compute_dtype=jnp.bfloat16):
    """Fuse per-head weights into MXU-friendly layouts (done once, host side).

    Q/K/V (nH, C, hs) -> single lane-dense (C, 3C) matrix with 1/sqrt(hs)
    folded into the Q columns; Wo (nH, hs, C) -> (C, C) so the concat+proj of
    the PyTorch module is a single K=C matmul. Weights are stored in
    `compute_dtype` (bf16 -> native single-pass MXU); LN params / biases stay f32.
    """
    wq, wk, wv, wo = params["wq"], params["wk"], params["wv"], params["wo"]
    n_heads, C, hs = wq.shape
    scale = 1.0 / math.sqrt(hs)

    def flat_in_out(w):                     # (nH, C, hs) -> (C, nH*hs)
        return jnp.transpose(w, (1, 0, 2)).reshape(C, n_heads * hs)

    wqkv = jnp.concatenate(
        [flat_in_out(wq) * scale, flat_in_out(wk), flat_in_out(wv)], axis=1)
    wo_full = wo.reshape(n_heads * hs, C)   # rows ordered as concat(head outputs)

    f32 = jnp.float32
    return dict(
        ln1_g=params["ln1_g"].astype(f32), ln1_b=params["ln1_b"].astype(f32),
        ln2_g=params["ln2_g"].astype(f32), ln2_b=params["ln2_b"].astype(f32),
        wqkv=wqkv.astype(compute_dtype), wo=wo_full.astype(compute_dtype),
        bo=params["bo"].astype(f32),
        w1=params["w1"].astype(compute_dtype), b1=params["b1"].astype(f32),
        w2=params["w2"].astype(compute_dtype), b2=params["b2"].astype(f32),
    )


@functools.partial(jax.jit, static_argnames=("n_heads",))
def block_forward(x, fp, *, n_heads):
    """x: (B, T, C). Returns (B, T, C) = Block(x) as in the PyTorch module."""
    B, T, C = x.shape
    h = _attention_block(x, fp["ln1_g"], fp["ln1_b"], fp["wqkv"], fp["wo"],
                         fp["bo"], n_heads=n_heads)
    h2d = h.reshape(B * T, C)
    out2d = _ffn_block(h2d, fp["ln2_g"], fp["ln2_b"],
                       fp["w1"], fp["b1"], fp["w2"], fp["b2"])
    return out2d.reshape(B, T, C)


def init_params(key, n_emb, n_heads, n_hidden):
    """Deterministic synthetic parameters (PyTorch-style init layouts)."""
    hs = n_emb // n_heads
    ks = jax.random.split(key, 9)
    bc = 1.0 / math.sqrt(n_emb)
    bh = 1.0 / math.sqrt(n_hidden)

    def u(k, shape, b):
        return jax.random.uniform(k, shape, jnp.float32, -b, b)

    return dict(
        ln1_g=jnp.ones((n_emb,), jnp.float32),
        ln1_b=jnp.zeros((n_emb,), jnp.float32),
        ln2_g=jnp.ones((n_emb,), jnp.float32),
        ln2_b=jnp.zeros((n_emb,), jnp.float32),
        # per-head q/k/v weights stored [head, in, out] (no bias, as in Head)
        wq=u(ks[0], (n_heads, n_emb, hs), bc),
        wk=u(ks[1], (n_heads, n_emb, hs), bc),
        wv=u(ks[2], (n_heads, n_emb, hs), bc),
        # output proj stored [head, hs, out]; sum_h o_h @ wo[h] == concat @ Wproj
        wo=u(ks[3], (n_heads, hs, n_emb), bc),
        bo=u(ks[4], (n_emb,), bc),
        w1=u(ks[5], (n_emb, n_hidden), bc),
        b1=u(ks[6], (n_hidden,), bc),
        w2=u(ks[7], (n_hidden, n_emb), bh),
        b2=u(ks[8], (n_emb,), bh),
    )


def block_reference(x, p):
    """Pure-JAX reference mirroring the PyTorch Block forward (f32, HIGHEST)."""
    hp = jax.lax.Precision.HIGHEST

    def ln(y, g, b):
        m = y.mean(-1, keepdims=True)
        v = ((y - m) ** 2).mean(-1, keepdims=True)
        return (y - m) / jnp.sqrt(v + _LN_EPS) * g + b

    B, T, C = x.shape
    nH, _, hs = p["wq"].shape
    h1 = ln(x, p["ln1_g"], p["ln1_b"])
    q = jnp.einsum("btc,hcd->bhtd", h1, p["wq"], precision=hp)
    k = jnp.einsum("btc,hcd->bhtd", h1, p["wk"], precision=hp)
    v = jnp.einsum("btc,hcd->bhtd", h1, p["wv"], precision=hp)
    s = jnp.einsum("bhtd,bhsd->bhts", q, k, precision=hp) / math.sqrt(hs)
    mask = jnp.tril(jnp.ones((T, T), bool))
    s = jnp.where(mask, s, _NEG_INF)
    a = jax.nn.softmax(s, axis=-1)
    o = jnp.einsum("bhts,bhsd->bhtd", a, v, precision=hp)
    o = jnp.einsum("bhtd,hdc->btc", o, p["wo"], precision=hp) + p["bo"]
    x = x + o
    h2 = ln(x, p["ln2_g"], p["ln2_b"])
    f = jnp.dot(h2, p["w1"], precision=hp) + p["b1"]
    f = 0.5 * f * (1.0 + lax.erf(f * _INV_SQRT2))
    f = jnp.dot(f, p["w2"], precision=hp) + p["b2"]
    return x + f


if __name__ == "__main__":
    # Small shapes: batch=2, seq=8, n_emb=32, n_heads=4 -> head_size=8, hidden=128
    B, T, n_emb, n_heads = 2, 8, 32, 4
    n_hidden = 4 * n_emb

    key = jax.random.PRNGKey(0)
    kx, kp = jax.random.split(key)
    x = jax.random.normal(kx, (B, T, n_emb), jnp.float32)
    params = init_params(kp, n_emb, n_heads, n_hidden)
    fused = prepare_block_params(params, compute_dtype=jnp.bfloat16)

    out = block_forward(x, fused, n_heads=n_heads)
    out = jax.block_until_ready(out)

    ref = block_reference(x, params)
    assert out.shape == (B, T, n_emb)
    # bf16 MXU inputs with f32 accumulation: tolerance loosened vs the
    # HIGHEST-precision f32 reference.
    err = float(jnp.max(jnp.abs(out - ref)))
    assert jnp.allclose(out, ref, atol=5e-2, rtol=5e-2), f"mismatch vs reference: {err}"

    print("KERNEL_OK")
</pallas_src>

<mosaic_0001>
module attributes {stable_mosaic.version = 11 : i64} {
  func.func @_ffn_block_kernel(%arg0: i32, %arg1: memref<16x32xf32, #tpu.memory_space<vmem>>, %arg2: memref<1x32xf32, #tpu.memory_space<vmem>>, %arg3: memref<1x32xf32, #tpu.memory_space<vmem>>, %arg4: memref<32x128xbf16, #tpu.memory_space<vmem>>, %arg5: memref<1x128xf32, #tpu.memory_space<vmem>>, %arg6: memref<128x32xbf16, #tpu.memory_space<vmem>>, %arg7: memref<1x32xf32, #tpu.memory_space<vmem>>, %arg8: memref<16x32xf32, #tpu.memory_space<vmem>>) attributes {dimension_semantics = [#tpu.dimension_semantics<parallel>], iteration_bounds = array<i64: 1>, scalar_prefetch = 0 : i64, scratch_operands = 0 : i64, tpu.core_type = #tpu.core_type<tc>, window_params = [{transform_indices = @transform_0, window_bounds = array<i64: 16, 32>}, {pipeline_mode = #tpu.pipeline_mode<synchronous>, transform_indices = @transform_1, window_bounds = array<i64: 1, 32>}, {pipeline_mode = #tpu.pipeline_mode<synchronous>, transform_indices = @transform_2, window_bounds = array<i64: 1, 32>}, {pipeline_mode = #tpu.pipeline_mode<synchronous>, transform_indices = @transform_3, window_bounds = array<i64: 32, 128>}, {pipeline_mode = #tpu.pipeline_mode<synchronous>, transform_indices = @transform_4, window_bounds = array<i64: 1, 128>}, {pipeline_mode = #tpu.pipeline_mode<synchronous>, transform_indices = @transform_5, window_bounds = array<i64: 128, 32>}, {pipeline_mode = #tpu.pipeline_mode<synchronous>, transform_indices = @transform_6, window_bounds = array<i64: 1, 32>}, {transform_indices = @transform_7, window_bounds = array<i64: 16, 32>}]} {
    %c0 = arith.constant 0 : index
    %c0_0 = arith.constant 0 : index
    %0 = vector.load %arg1[%c0, %c0_0] : memref<16x32xf32, #tpu.memory_space<vmem>>, vector<16x32xf32>
    %c0_1 = arith.constant 0 : index
    %c0_2 = arith.constant 0 : index
    %1 = vector.load %arg2[%c0_1, %c0_2] : memref<1x32xf32, #tpu.memory_space<vmem>>, vector<1x32xf32>
    %c0_3 = arith.constant 0 : index
    %c0_4 = arith.constant 0 : index
    %2 = vector.load %arg3[%c0_3, %c0_4] : memref<1x32xf32, #tpu.memory_space<vmem>>, vector<1x32xf32>
    %cst = arith.constant dense<0.000000e+00> : vector<16xf32>
    %3 = vector.multi_reduction <add>, %0, %cst [1] : vector<16x32xf32> to vector<16xf32>
    %4 = vector.shape_cast %3 : vector<16xf32> to vector<16x1xf32>
    %cst_5 = arith.constant 3.200000e+01 : f32
    %5 = vector.broadcast %cst_5 : f32 to vector<16x1xf32>
    %6 = arith.divf %4, %5 : vector<16x1xf32>
    %7 = vector.broadcast %6 : vector<16x1xf32> to vector<16x32xf32>
    %8 = arith.subf %0, %7 : vector<16x32xf32>
    %9 = arith.mulf %8, %8 : vector<16x32xf32>
    %cst_6 = arith.constant dense<0.000000e+00> : vector<16xf32>
    %10 = vector.multi_reduction <add>, %9, %cst_6 [1] : vector<16x32xf32> to vector<16xf32>
    %11 = vector.shape_cast %10 : vector<16xf32> to vector<16x1xf32>
    %cst_7 = arith.constant 3.200000e+01 : f32
    %12 = vector.broadcast %cst_7 : f32 to vector<16x1xf32>
    %13 = arith.divf %11, %12 : vector<16x1xf32>
    %14 = vector.broadcast %6 : vector<16x1xf32> to vector<16x32xf32>
    %15 = arith.subf %0, %14 : vector<16x32xf32>
    %cst_8 = arith.constant 9.99999974E-6 : f32
    %16 = vector.broadcast %cst_8 : f32 to vector<16x1xf32>
    %17 = arith.addf %13, %16 : vector<16x1xf32>
    %18 = math.rsqrt %17 : vector<16x1xf32>
    %19 = vector.broadcast %18 : vector<16x1xf32> to vector<16x32xf32>
    %20 = arith.mulf %15, %19 : vector<16x32xf32>
    %21 = vector.broadcast %1 : vector<1x32xf32> to vector<16x32xf32>
    %22 = arith.mulf %20, %21 : vector<16x32xf32>
    %23 = vector.broadcast %2 : vector<1x32xf32> to vector<16x32xf32>
    %24 = arith.addf %22, %23 : vector<16x32xf32>
    %25 = arith.truncf %24 : vector<16x32xf32> to vector<16x32xbf16>
    %cst_9 = arith.constant 0.000000e+00 : f32
    %26 = vector.broadcast %cst_9 : f32 to vector<16x32xf32>
    %c0_10 = arith.constant 0 : index
    %c0_11 = arith.constant 0 : index
    %27 = vector.load %arg4[%c0_10, %c0_11] : memref<32x128xbf16, #tpu.memory_space<vmem>>, vector<32x128xbf16>
    %cst_12 = arith.constant dense<0.000000e+00> : vector<16x128xf32>
    %28 = tpu.matmul %25, %27, %cst_12 {dimension_numbers = #tpu.dot_dimension_numbers<[1], [0], [0], [1], [0, 0, 1, 1], [], []>} : vector<16x32xbf16>, vector<32x128xbf16>, vector<16x128xf32> -> vector<16x128xf32>
    %c0_13 = arith.constant 0 : index
    %c0_14 = arith.constant 0 : index
    %29 = vector.load %arg5[%c0_13, %c0_14] : memref<1x128xf32, #tpu.memory_space<vmem>>, vector<1x128xf32>
    %30 = vector.broadcast %29 : vector<1x128xf32> to vector<16x128xf32>
    %31 = arith.addf %28, %30 : vector<16x128xf32>
    %cst_15 = arith.constant 5.000000e-01 : f32
    %32 = vector.broadcast %cst_15 : f32 to vector<16x128xf32>
    %33 = arith.mulf %32, %31 : vector<16x128xf32>
    %cst_16 = arith.constant 0.707106769 : f32
    %34 = vector.broadcast %cst_16 : f32 to vector<16x128xf32>
    %35 = arith.mulf %31, %34 : vector<16x128xf32>
    %36 = math.erf %35 : vector<16x128xf32>
    %cst_17 = arith.constant 1.000000e+00 : f32
    %37 = vector.broadcast %cst_17 : f32 to vector<16x128xf32>
    %38 = arith.addf %37, %36 : vector<16x128xf32>
    %39 = arith.mulf %33, %38 : vector<16x128xf32>
    %40 = arith.truncf %39 : vector<16x128xf32> to vector<16x128xbf16>
    %c0_18 = arith.constant 0 : index
    %c0_19 = arith.constant 0 : index
    %41 = vector.load %arg6[%c0_18, %c0_19] : memref<128x32xbf16, #tpu.memory_space<vmem>>, vector<128x32xbf16>
    %cst_20 = arith.constant dense<0.000000e+00> : vector<16x32xf32>
    %42 = tpu.matmul %40, %41, %cst_20 {dimension_numbers = #tpu.dot_dimension_numbers<[1], [0], [0], [1], [0, 0, 1, 1], [], []>} : vector<16x128xbf16>, vector<128x32xbf16>, vector<16x32xf32> -> vector<16x32xf32>
    %43 = arith.addf %26, %42 : vector<16x32xf32>
    %c0_21 = arith.constant 0 : index
    %c0_22 = arith.constant 0 : index
    %44 = vector.load %arg7[%c0_21, %c0_22] : memref<1x32xf32, #tpu.memory_space<vmem>>, vector<1x32xf32>
    %45 = vector.broadcast %44 : vector<1x32xf32> to vector<16x32xf32>
    %46 = arith.addf %43, %45 : vector<16x32xf32>
    %47 = arith.addf %0, %46 : vector<16x32xf32>
    %c0_23 = arith.constant 0 : index
    %c0_24 = arith.constant 0 : index
    %48 = vector.load %arg8[%c0_23, %c0_24] : memref<16x32xf32, #tpu.memory_space<vmem>>, vector<16x32xf32>
    tpu.vector_store %arg8[%c0_23, %c0_24], %47 {strides = array<i32>} : memref<16x32xf32, #tpu.memory_space<vmem>>, vector<16x32xf32>,
    return
  }
  func.func @transform_0(%arg0: i32) -> (i32, i32) {
    %c0_i32 = arith.constant 0 : i32
    %c0_i32_0 = arith.constant 0 : i32
    return %arg0, %c0_i32 : i32, i32
  }
  func.func @transform_1(%arg0: i32) -> (i32, i32) {
    %c0_i32 = arith.constant 0 : i32
    %c0_i32_0 = arith.constant 0 : i32
    %c0_i32_1 = arith.constant 0 : i32
    return %c0_i32, %c0_i32_0 : i32, i32
  }
  func.func @transform_2(%arg0: i32) -> (i32, i32) {
    %c0_i32 = arith.constant 0 : i32
    %c0_i32_0 = arith.constant 0 : i32
    %c0_i32_1 = arith.constant 0 : i32
    return %c0_i32, %c0_i32_0 : i32, i32
  }
  func.func @transform_3(%arg0: i32) -> (i32, i32) {
    %c0_i32 = arith.constant 0 : i32
    %c0_i32_0 = arith.constant 0 : i32
    %c0_i32_1 = arith.constant 0 : i32
    return %c0_i32, %c0_i32_0 : i32, i32
  }
  func.func @transform_4(%arg0: i32) -> (i32, i32) {
    %c0_i32 = arith.constant 0 : i32
    %c0_i32_0 = arith.constant 0 : i32
    %c0_i32_1 = arith.constant 0 : i32
    return %c0_i32, %c0_i32_0 : i32, i32
  }
  func.func @transform_5(%arg0: i32) -> (i32, i32) {
    %c0_i32 = arith.constant 0 : i32
    %c0_i32_0 = arith.constant 0 : i32
    %c0_i32_1 = arith.constant 0 : i32
    return %c0_i32, %c0_i32_0 : i32, i32
  }
  func.func @transform_6(%arg0: i32) -> (i32, i32) {
    %c0_i32 = arith.constant 0 : i32
    %c0_i32_0 = arith.constant 0 : i32
    %c0_i32_1 = arith.constant 0 : i32
    return %c0_i32, %c0_i32_0 : i32, i32
  }
  func.func @transform_7(%arg0: i32) -> (i32, i32) {
    %c0_i32 = arith.constant 0 : i32
    %c0_i32_0 = arith.constant 0 : i32
    return %arg0, %c0_i32 : i32, i32
  }
}

module attributes {stable_mosaic.version = 11 : i64} {
  func.func @_attn_block_kernel(%arg0: i32, %arg1: memref<1x8x32xf32, #tpu.memory_space<vmem>>, %arg2: memref<1x32xf32, #tpu.memory_space<vmem>>, %arg3: memref<1x32xf32, #tpu.memory_space<vmem>>, %arg4: memref<32x96xbf16, #tpu.memory_space<vmem>>, %arg5: memref<32x32xbf16, #tpu.memory_space<vmem>>, %arg6: memref<1x32xf32, #tpu.memory_space<vmem>>, %arg7: memref<1x8x32xf32, #tpu.memory_space<vmem>>) attributes {dimension_semantics = [#tpu.dimension_semantics<parallel>], iteration_bounds = array<i64: 2>, scalar_prefetch = 0 : i64, scratch_operands = 0 : i64, tpu.core_type = #tpu.core_type<tc>, window_params = [{transform_indices = @transform_0, window_bounds = array<i64: 1, 8, 32>}, {pipeline_mode = #tpu.pipeline_mode<synchronous>, transform_indices = @transform_1, window_bounds = array<i64: 1, 32>}, {pipeline_mode = #tpu.pipeline_mode<synchronous>, transform_indices = @transform_2, window_bounds = array<i64: 1, 32>}, {pipeline_mode = #tpu.pipeline_mode<synchronous>, transform_indices = @transform_3, window_bounds = array<i64: 32, 96>}, {pipeline_mode = #tpu.pipeline_mode<synchronous>, transform_indices = @transform_4, window_bounds = array<i64: 32, 32>}, {pipeline_mode = #tpu.pipeline_mode<synchronous>, transform_indices = @transform_5, window_bounds = array<i64: 1, 32>}, {transform_indices = @transform_6, window_bounds = array<i64: 1, 8, 32>}]} {
    %c0 = arith.constant 0 : index
    %c0_0 = arith.constant 0 : index
    %c0_1 = arith.constant 0 : index
    %0 = vector.load %arg1[%c0, %c0_0, %c0_1] : memref<1x8x32xf32, #tpu.memory_space<vmem>>, vector<1x8x32xf32>
    %1 = vector.shape_cast %0 : vector<1x8x32xf32> to vector<8x32xf32>
    %c0_2 = arith.constant 0 : index
    %c0_3 = arith.constant 0 : index
    %2 = vector.load %arg2[%c0_2, %c0_3] : memref<1x32xf32, #tpu.memory_space<vmem>>, vector<1x32xf32>
    %c0_4 = arith.constant 0 : index
    %c0_5 = arith.constant 0 : index
    %3 = vector.load %arg3[%c0_4, %c0_5] : memref<1x32xf32, #tpu.memory_space<vmem>>, vector<1x32xf32>
    %cst = arith.constant dense<0.000000e+00> : vector<8xf32>
    %4 = vector.multi_reduction <add>, %1, %cst [1] : vector<8x32xf32> to vector<8xf32>
    %5 = vector.shape_cast %4 : vector<8xf32> to vector<8x1xf32>
    %cst_6 = arith.constant 3.200000e+01 : f32
    %6 = vector.broadcast %cst_6 : f32 to vector<8x1xf32>
    %7 = arith.divf %5, %6 : vector<8x1xf32>
    %8 = vector.broadcast %7 : vector<8x1xf32> to vector<8x32xf32>
    %9 = arith.subf %1, %8 : vector<8x32xf32>
    %10 = arith.mulf %9, %9 : vector<8x32xf32>
    %cst_7 = arith.constant dense<0.000000e+00> : vector<8xf32>
    %11 = vector.multi_reduction <add>, %10, %cst_7 [1] : vector<8x32xf32> to vector<8xf32>
    %12 = vector.shape_cast %11 : vector<8xf32> to vector<8x1xf32>
    %cst_8 = arith.constant 3.200000e+01 : f32
    %13 = vector.broadcast %cst_8 : f32 to vector<8x1xf32>
    %14 = arith.divf %12, %13 : vector<8x1xf32>
    %15 = vector.broadcast %7 : vector<8x1xf32> to vector<8x32xf32>
    %16 = arith.subf %1, %15 : vector<8x32xf32>
    %cst_9 = arith.constant 9.99999974E-6 : f32
    %17 = vector.broadcast %cst_9 : f32 to vector<8x1xf32>
    %18 = arith.addf %14, %17 : vector<8x1xf32>
    %19 = math.rsqrt %18 : vector<8x1xf32>
    %20 = vector.broadcast %19 : vector<8x1xf32> to vector<8x32xf32>
    %21 = arith.mulf %16, %20 : vector<8x32xf32>
    %22 = vector.broadcast %2 : vector<1x32xf32> to vector<8x32xf32>
    %23 = arith.mulf %21, %22 : vector<8x32xf32>
    %24 = vector.broadcast %3 : vector<1x32xf32> to vector<8x32xf32>
    %25 = arith.addf %23, %24 : vector<8x32xf32>
    %26 = arith.truncf %25 : vector<8x32xf32> to vector<8x32xbf16>
    %c0_10 = arith.constant 0 : index
    %c0_11 = arith.constant 0 : index
    %27 = vector.load %arg4[%c0_10, %c0_11] : memref<32x96xbf16, #tpu.memory_space<vmem>>, vector<32x96xbf16>
    %cst_12 = arith.constant dense<0.000000e+00> : vector<8x96xf32>
    %28 = tpu.matmul %26, %27, %cst_12 {dimension_numbers = #tpu.dot_dimension_numbers<[1], [0], [0], [1], [0, 0, 1, 1], [], []>} : vector<8x32xbf16>, vector<32x96xbf16>, vector<8x96xf32> -> vector<8x96xf32>
    %29 = tpu.iota {dimensions = array<i32: 0>} : vector<8x8xi32>
    %30 = tpu.iota {dimensions = array<i32: 1>} : vector<8x8xi32>
    %31 = arith.cmpi sle, %30, %29 : vector<8x8xi32>
    %32 = vector.extract_strided_slice %28 {offsets = [0, 0], sizes = [8, 8], strides = [1, 1]} : vector<8x96xf32> to vector<8x8xf32>
    %33 = arith.truncf %32 : vector<8x8xf32> to vector<8x8xbf16>
    %34 = vector.extract_strided_slice %28 {offsets = [0, 32], sizes = [8, 8], strides = [1, 1]} : vector<8x96xf32> to vector<8x8xf32>
    %35 = arith.truncf %34 : vector<8x8xf32> to vector<8x8xbf16>
    %36 = vector.extract_strided_slice %28 {offsets = [0, 64], sizes = [8, 8], strides = [1, 1]} : vector<8x96xf32> to vector<8x8xf32>
    %37 = arith.truncf %36 : vector<8x8xf32> to vector<8x8xbf16>
    %cst_13 = arith.constant dense<0.000000e+00> : vector<8x8xf32>
    %38 = tpu.matmul %33, %35, %cst_13 {dimension_numbers = #tpu.dot_dimension_numbers<[1], [1], [0], [0], [0, 0, 1, 0], [], []>} : vector<8x8xbf16>, vector<8x8xbf16>, vector<8x8xf32> -> vector<8x8xf32>
    %cst_14 = arith.constant -1.000000e+30 : f32
    %39 = vector.broadcast %cst_14 : f32 to vector<8x8xf32>
    %40 = arith.select %31, %38, %39 : vector<8x8xi1>, vector<8x8xf32>
    %cst_15 = arith.constant dense<0xFF800000> : vector<8xf32>
    %41 = vector.multi_reduction <maximumf>, %40, %cst_15 [1] : vector<8x8xf32> to vector<8xf32>
    %42 = vector.shape_cast %41 : vector<8xf32> to vector<8x1xf32>
    %43 = vector.broadcast %42 : vector<8x1xf32> to vector<8x8xf32>
    %44 = arith.subf %40, %43 : vector<8x8xf32>
    %45 = math.exp %44 : vector<8x8xf32>
    %cst_16 = arith.constant dense<0.000000e+00> : vector<8xf32>
    %46 = vector.multi_reduction <add>, %45, %cst_16 [1] : vector<8x8xf32> to vector<8xf32>
    %47 = vector.shape_cast %46 : vector<8xf32> to vector<8x1xf32>
    %48 = tpu.reciprocal %47 {approx = true} : vector<8x1xf32> -> vector<8x1xf32>
    %49 = vector.broadcast %48 : vector<8x1xf32> to vector<8x8xf32>
    %50 = arith.mulf %45, %49 : vector<8x8xf32>
    %51 = arith.truncf %50 : vector<8x8xf32> to vector<8x8xbf16>
    %cst_17 = arith.constant dense<0.000000e+00> : vector<8x8xf32>
    %52 = tpu.matmul %51, %37, %cst_17 {dimension_numbers = #tpu.dot_dimension_numbers<[1], [0], [0], [1], [0, 0, 1, 1], [], []>} : vector<8x8xbf16>, vector<8x8xbf16>, vector<8x8xf32> -> vector<8x8xf32>
    %53 = vector.extract_strided_slice %28 {offsets = [0, 8], sizes = [8, 8], strides = [1, 1]} : vector<8x96xf32> to vector<8x8xf32>
    %54 = arith.truncf %53 : vector<8x8xf32> to vector<8x8xbf16>
    %55 = vector.extract_strided_slice %28 {offsets = [0, 40], sizes = [8, 8], strides = [1, 1]} : vector<8x96xf32> to vector<8x8xf32>
    %56 = arith.truncf %55 : vector<8x8xf32> to vector<8x8xbf16>
    %57 = vector.extract_strided_slice %28 {offsets = [0, 72], sizes = [8, 8], strides = [1, 1]} : vector<8x96xf32> to vector<8x8xf32>
    %58 = arith.truncf %57 : vector<8x8xf32> to vector<8x8xbf16>
    %cst_18 = arith.constant dense<0.000000e+00> : vector<8x8xf32>
    %59 = tpu.matmul %54, %56, %cst_18 {dimension_numbers = #tpu.dot_dimension_numbers<[1], [1], [0], [0], [0, 0, 1, 0], [], []>} : vector<8x8xbf16>, vector<8x8xbf16>, vector<8x8xf32> -> vector<8x8xf32>
    %cst_19 = arith.constant -1.000000e+30 : f32
    %60 = vector.broadcast %cst_19 : f32 to vector<8x8xf32>
    %61 = arith.select %31, %59, %60 : vector<8x8xi1>, vector<8x8xf32>
    %cst_20 = arith.constant dense<0xFF800000> : vector<8xf32>
    %62 = vector.multi_reduction <maximumf>, %61, %cst_20 [1] : vector<8x8xf32> to vector<8xf32>
    %63 = vector.shape_cast %62 : vector<8xf32> to vector<8x1xf32>
    %64 = vector.broadcast %63 : vector<8x1xf32> to vector<8x8xf32>
    %65 = arith.subf %61, %64 : vector<8x8xf32>
    %66 = math.exp %65 : vector<8x8xf32>
    %cst_21 = arith.constant dense<0.000000e+00> : vector<8xf32>
    %67 = vector.multi_reduction <add>, %66, %cst_21 [1] : vector<8x8xf32> to vector<8xf32>
    %68 = vector.shape_cast %67 : vector<8xf32> to vector<8x1xf32>
    %69 = tpu.reciprocal %68 {approx = true} : vector<8x1xf32> -> vector<8x1xf32>
    %70 = vector.broadcast %69 : vector<8x1xf32> to vector<8x8xf32>
    %71 = arith.mulf %66, %70 : vector<8x8xf32>
    %72 = arith.truncf %71 : vector<8x8xf32> to vector<8x8xbf16>
    %cst_22 = arith.constant dense<0.000000e+00> : vector<8x8xf32>
    %73 = tpu.matmul %72, %58, %cst_22 {dimension_numbers = #tpu.dot_dimension_numbers<[1], [0], [0], [1], [0, 0, 1, 1], [], []>} : vector<8x8xbf16>, vector<8x8xbf16>, vector<8x8xf32> -> vector<8x8xf32>
    %74 = vector.extract_strided_slice %28 {offsets = [0, 16], sizes = [8, 8], strides = [1, 1]} : vector<8x96xf32> to vector<8x8xf32>
    %75 = arith.truncf %74 : vector<8x8xf32> to vector<8x8xbf16>
    %76 = vector.extract_strided_slice %28 {offsets = [0, 48], sizes = [8, 8], strides = [1, 1]} : vector<8x96xf32> to vector<8x8xf32>
    %77 = arith.truncf %76 : vector<8x8xf32> to vector<8x8xbf16>
    %78 = vector.extract_strided_slice %28 {offsets = [0, 80], sizes = [8, 8], strides = [1, 1]} : vector<8x96xf32> to vector<8x8xf32>
    %79 = arith.truncf %78 : vector<8x8xf32> to vector<8x8xbf16>
    %cst_23 = arith.constant dense<0.000000e+00> : vector<8x8xf32>
    %80 = tpu.matmul %75, %77, %cst_23 {dimension_numbers = #tpu.dot_dimension_numbers<[1], [1], [0], [0], [0, 0, 1, 0], [], []>} : vector<8x8xbf16>, vector<8x8xbf16>, vector<8x8xf32> -> vector<8x8xf32>
    %cst_24 = arith.constant -1.000000e+30 : f32
    %81 = vector.broadcast %cst_24 : f32 to vector<8x8xf32>
    %82 = arith.select %31, %80, %81 : vector<8x8xi1>, vector<8x8xf32>
    %cst_25 = arith.constant dense<0xFF800000> : vector<8xf32>
    %83 = vector.multi_reduction <maximumf>, %82, %cst_25 [1] : vector<8x8xf32> to vector<8xf32>
    %84 = vector.shape_cast %83 : vector<8xf32> to vector<8x1xf32>
    %85 = vector.broadcast %84 : vector<8x1xf32> to vector<8x8xf32>
    %86 = arith.subf %82, %85 : vector<8x8xf32>
    %87 = math.exp %86 : vector<8x8xf32>
    %cst_26 = arith.constant dense<0.000000e+00> : vector<8xf32>
    %88 = vector.multi_reduction <add>, %87, %cst_26 [1] : vector<8x8xf32> to vector<8xf32>
    %89 = vector.shape_cast %88 : vector<8xf32> to vector<8x1xf32>
    %90 = tpu.reciprocal %89 {approx = true} : vector<8x1xf32> -> vector<8x1xf32>
    %91 = vector.broadcast %90 : vector<8x1xf32> to vector<8x8xf32>
    %92 = arith.mulf %87, %91 : vector<8x8xf32>
    %93 = arith.truncf %92 : vector<8x8xf32> to vector<8x8xbf16>
    %cst_27 = arith.constant dense<0.000000e+00> : vector<8x8xf32>
    %94 = tpu.matmul %93, %79, %cst_27 {dimension_numbers = #tpu.dot_dimension_numbers<[1], [0], [0], [1], [0, 0, 1, 1], [], []>} : vector<8x8xbf16>, vector<8x8xbf16>, vector<8x8xf32> -> vector<8x8xf32>
    %95 = vector.extract_strided_slice %28 {offsets = [0, 24], sizes = [8, 8], strides = [1, 1]} : vector<8x96xf32> to vector<8x8xf32>
    %96 = arith.truncf %95 : vector<8x8xf32> to vector<8x8xbf16>
    %97 = vector.extract_strided_slice %28 {offsets = [0, 56], sizes = [8, 8], strides = [1, 1]} : vector<8x96xf32> to vector<8x8xf32>
    %98 = arith.truncf %97 : vector<8x8xf32> to vector<8x8xbf16>
    %99 = vector.extract_strided_slice %28 {offsets = [0, 88], sizes = [8, 8], strides = [1, 1]} : vector<8x96xf32> to vector<8x8xf32>
    %100 = arith.truncf %99 : vector<8x8xf32> to vector<8x8xbf16>
    %cst_28 = arith.constant dense<0.000000e+00> : vector<8x8xf32>
    %101 = tpu.matmul %96, %98, %cst_28 {dimension_numbers = #tpu.dot_dimension_numbers<[1], [1], [0], [0], [0, 0, 1, 0], [], []>} : vector<8x8xbf16>, vector<8x8xbf16>, vector<8x8xf32> -> vector<8x8xf32>
    %cst_29 = arith.constant -1.000000e+30 : f32
    %102 = vector.broadcast %cst_29 : f32 to vector<8x8xf32>
    %103 = arith.select %31, %101, %102 : vector<8x8xi1>, vector<8x8xf32>
    %cst_30 = arith.constant dense<0xFF800000> : vector<8xf32>
    %104 = vector.multi_reduction <maximumf>, %103, %cst_30 [1] : vector<8x8xf32> to vector<8xf32>
    %105 = vector.shape_cast %104 : vector<8xf32> to vector<8x1xf32>
    %106 = vector.broadcast %105 : vector<8x1xf32> to vector<8x8xf32>
    %107 = arith.subf %103, %106 : vector<8x8xf32>
    %108 = math.exp %107 : vector<8x8xf32>
    %cst_31 = arith.constant dense<0.000000e+00> : vector<8xf32>
    %109 = vector.multi_reduction <add>, %108, %cst_31 [1] : vector<8x8xf32> to vector<8xf32>
    %110 = vector.shape_cast %109 : vector<8xf32> to vector<8x1xf32>
    %111 = tpu.reciprocal %110 {approx = true} : vector<8x1xf32> -> vector<8x1xf32>
    %112 = vector.broadcast %111 : vector<8x1xf32> to vector<8x8xf32>
    %113 = arith.mulf %108, %112 : vector<8x8xf32>
    %114 = arith.truncf %113 : vector<8x8xf32> to vector<8x8xbf16>
    %cst_32 = arith.constant dense<0.000000e+00> : vector<8x8xf32>
    %115 = tpu.matmul %114, %100, %cst_32 {dimension_numbers = #tpu.dot_dimension_numbers<[1], [0], [0], [1], [0, 0, 1, 1], [], []>} : vector<8x8xbf16>, vector<8x8xbf16>, vector<8x8xf32> -> vector<8x8xf32>
    %116 = tpu.concatenate %52, %73, %94, %115 in 1 : vector<8x8xf32>, vector<8x8xf32>, vector<8x8xf32>, vector<8x8xf32> -> vector<8x32xf32>
    %117 = arith.truncf %116 : vector<8x32xf32> to vector<8x32xbf16>
    %c0_33 = arith.constant 0 : index
    %c0_34 = arith.constant 0 : index
    %118 = vector.load %arg5[%c0_33, %c0_34] : memref<32x32xbf16, #tpu.memory_space<vmem>>, vector<32x32xbf16>
    %cst_35 = arith.constant dense<0.000000e+00> : vector<8x32xf32>
    %119 = tpu.matmul %117, %118, %cst_35 {dimension_numbers = #tpu.dot_dimension_numbers<[1], [0], [0], [1], [0, 0, 1, 1], [], []>} : vector<8x32xbf16>, vector<32x32xbf16>, vector<8x32xf32> -> vector<8x32xf32>
    %c0_36 = arith.constant 0 : index
    %c0_37 = arith.constant 0 : index
    %120 = vector.load %arg6[%c0_36, %c0_37] : memref<1x32xf32, #tpu.memory_space<vmem>>, vector<1x32xf32>
    %121 = vector.broadcast %120 : vector<1x32xf32> to vector<8x32xf32>
    %122 = arith.addf %119, %121 : vector<8x32xf32>
    %123 = arith.addf %1, %122 : vector<8x32xf32>
    %c0_38 = arith.constant 0 : index
    %c0_39 = arith.constant 0 : index
    %c0_40 = arith.constant 0 : index
    %124 = vector.load %arg7[%c0_38, %c0_39, %c0_40] : memref<1x8x32xf32, #tpu.memory_space<vmem>>, vector<1x8x32xf32>
    %125 = vector.shape_cast %124 : vector<1x8x32xf32> to vector<8x32xf32>
    %126 = vector.shape_cast %123 : vector<8x32xf32> to vector<1x8x32xf32>
    tpu.vector_store %arg7[%c0_38, %c0_39, %c0_40], %126 {strides = array<i32>} : memref<1x8x32xf32, #tpu.memory_space<vmem>>, vector<1x8x32xf32>,
    return
  }
  func.func @transform_0(%arg0: i32) -> (i32, i32, i32) {
    %c0_i32 = arith.constant 0 : i32
    %c0_i32_0 = arith.constant 0 : i32
    %c0_i32_1 = arith.constant 0 : i32
    return %arg0, %c0_i32, %c0_i32_0 : i32, i32, i32
  }
  func.func @transform_1(%arg0: i32) -> (i32, i32) {
    %c0_i32 = arith.constant 0 : i32
    %c0_i32_0 = arith.constant 0 : i32
    %c0_i32_1 = arith.constant 0 : i32
    return %c0_i32, %c0_i32_0 : i32, i32
  }
  func.func @transform_2(%arg0: i32) -> (i32, i32) {
    %c0_i32 = arith.constant 0 : i32
    %c0_i32_0 = arith.constant 0 : i32
    %c0_i32_1 = arith.constant 0 : i32
    return %c0_i32, %c0_i32_0 : i32, i32
  }
  func.func @transform_3(%arg0: i32) -> (i32, i32) {
    %c0_i32 = arith.constant 0 : i32
    %c0_i32_0 = arith.constant 0 : i32
    %c0_i32_1 = arith.constant 0 : i32
    return %c0_i32, %c0_i32_0 : i32, i32
  }
  func.func @transform_4(%arg0: i32) -> (i32, i32) {
    %c0_i32 = arith.constant 0 : i32
    %c0_i32_0 = arith.constant 0 : i32
    %c0_i32_1 = arith.constant 0 : i32
    return %c0_i32, %c0_i32_0 : i32, i32
  }
  func.func @transform_5(%arg0: i32) -> (i32, i32) {
    %c0_i32 = arith.constant 0 : i32
    %c0_i32_0 = arith.constant 0 : i32
    %c0_i32_1 = arith.constant 0 : i32
    return %c0_i32, %c0_i32_0 : i32, i32
  }
  func.func @transform_6(%arg0: i32) -> (i32, i32, i32) {
    %c0_i32 = arith.constant 0 : i32
    %c0_i32_0 = arith.constant 0 : i32
    %c0_i32_1 = arith.constant 0 : i32
    return %arg0, %c0_i32, %c0_i32_0 : i32, i32, i32
  }
}

</mosaic_0001>

<llo_original>
// kernel: block_forward.3
$region0: #{block_forward.3}
  #allocation0 [shape = 'u32[]', space=smem, size = 0x4, offset = 0x4, fixed_abs, tag = 'smem constant byte address 0x4 - core index']
  #allocation1 [shape = 'u32[72,128]{1,0:T(1,128)}', space=vmem, size = 0x9000, scoped, tag = 'internal scratch']
  %s0 = inlined_call_operand.vmem [shape: f32[16,32], index: 0, kind: input, shape index: {}]
  %s1 = inlined_call_operand.vmem [shape: f32[1,32], index: 1, kind: input, shape index: {}]
  %s2 = inlined_call_operand.vmem [shape: f32[1,32], index: 2, kind: input, shape index: {}]
  %s3 = inlined_call_operand.vmem [shape: bf16[32,128], index: 3, kind: input, shape index: {}]
  %s4 = inlined_call_operand.vmem [shape: f32[1,128], index: 4, kind: input, shape index: {}]
  %s5 = inlined_call_operand.vmem [shape: bf16[128,32], index: 5, kind: input, shape index: {}]
  %s6 = inlined_call_operand.vmem [shape: f32[1,32], index: 6, kind: input, shape index: {}]
  %s7 = inlined_call_operand.hbm [shape: f32[16,32], index: 7, kind: output, shape index: {}]
  %s8 = sld [smem:[#allocation0]]
  $region38: #{block_forward.3} parent=0
    _
  %s10 = ssub.s32 1, %s8
  %s11 = scalar_select 0, %s10, %s8
  $region1: #{block_forward.3} parent=0
    #allocation2 [shape = 'u8[8192]{0}', space=vmem, size = 0x2000, scoped, tag = 'output window, operand 0, single buffered']
    #allocation3 [shape = 's32[1]{0}', space=sflag, size = 0x4, scoped, tag = 'scoped memory for block_forward.3']
    %12 = vsyncpa [#allocation3], 0
    // Predicated region
    $region2: #{block_forward.3} parent=1 // pred_check
      _
    $region3: #{block_forward.3} parent=1 // pred_check_branch
      %14 = sbr.rel (0) target = $region5
    $region4: #{block_forward.3} parent=1 // pred_region
      _
    $region5: #{block_forward.3} parent=1 // pred_fallthru
      _
    // Predicated region
    $region6: #{block_forward.3} parent=1 // pred_check
      _
    $region7: #{block_forward.3} parent=1 // pred_check_branch
      %16 = sbr.rel (0) target = $region9
    $region8: #{block_forward.3} parent=1 // pred_region
      _
    $region9: #{block_forward.3} parent=1 // pred_fallthru
      _
    // Predicated region
    $region10: #{block_forward.3} parent=1 // pred_check
      _
    $region11: #{block_forward.3} parent=1 // pred_check_branch
      %18 = sbr.rel (0) target = $region13
    $region12: #{block_forward.3} parent=1 // pred_region
      _
    $region13: #{block_forward.3} parent=1 // pred_fallthru
      _
    // Predicated region
    $region14: #{block_forward.3} parent=1 // pred_check
      _
    $region15: #{block_forward.3} parent=1 // pred_check_branch
      %20 = sbr.rel (0) target = $region17
    $region16: #{block_forward.3} parent=1 // pred_region
      _
    $region17: #{block_forward.3} parent=1 // pred_fallthru
      _
    // Predicated region
    $region18: #{block_forward.3} parent=1 // pred_check
      _
    $region19: #{block_forward.3} parent=1 // pred_check_branch
      %22 = sbr.rel (0) target = $region21
    $region20: #{block_forward.3} parent=1 // pred_region
      _
    $region21: #{block_forward.3} parent=1 // pred_fallthru
      _
    // Predicated region
    $region22: #{block_forward.3} parent=1 // pred_check
      _
    $region23: #{block_forward.3} parent=1 // pred_check_branch
      %24 = sbr.rel (0) target = $region25
    $region24: #{block_forward.3} parent=1 // pred_region
      _
    $region25: #{block_forward.3} parent=1 // pred_fallthru
      _
    // Predicated region
    $region26: #{block_forward.3} parent=1 // pred_check
      _
    $region27: #{block_forward.3} parent=1 // pred_check_branch
      %26 = sbr.rel (0) target = $region29
    $region28: #{block_forward.3} parent=1 // pred_region
      _
    $region29: #{block_forward.3} parent=1 // pred_fallthru
      _
    %v28 = vld [vmem:[%s0] sm:$0xff]
    %v29 = vld [vmem:[%s0 + $0x8] sm:$0xff]
    %v30 = vld [vmem:[%s1] sm:$0x1]
    %v31 = vld [vmem:[%s2] sm:$0x1]
    %vm32 = vcmask 261120
    %v33 = vsel %vm32, %v28, 0.0
    %34 = vadd.xlane.f32.xlu0 %v33
    %v35 = vpop.xlane.xlu0 %34
    %v36 = vsel %vm32, %v29, 0.0
    %37 = vadd.xlane.f32.xlu0 %v36
    %v38 = vpop.xlane.xlu0 %37
    %v39 = vrcp.pop 32.0
    %v40 = vmul.f32 32.0, %v39
    %v41 = vsub.f32 1.0, %v40
    %v42 = vmul.f32 %v39, %v41
    %v43 = vadd.f32 %v39, %v42
    %vm44 = vweird.f32 %v39
    %v45 = vsel %vm44, %v39, %v43
    %v46 = vmul.f32 %v35, %v45
    %v47 = vmul.f32 %v38, %v45
    %v48 = vsub.f32 %v28, %v46
    %v49 = vsub.f32 %v29, %v47
    %v50 = vmul.f32 %v48, %v48
    %v51 = vmul.f32 %v49, %v49
    %v52 = vsel %vm32, %v50, 0.0
    %53 = vadd.xlane.f32.xlu0 %v52
    %v54 = vpop.xlane.xlu0 %53
    %v55 = vsel %vm32, %v51, 0.0
    %56 = vadd.xlane.f32.xlu0 %v55
    %v57 = vpop.xlane.xlu0 %56
    %v58 = vmul.f32 %v54, %v45
    %v59 = vmul.f32 %v57, %v45
    %v60 = vadd.f32 %v58, 1e-05
    %v61 = vadd.f32 %v59, 1e-05
    %v62 = vrsqrt.pop %v60
    %v63 = vmul.f32 %v62, %v60
    %v64 = vmul.f32 %v63, %v62
    %v65 = vmul.f32 0.5, %v64
    %v66 = vsub.f32 1.5, %v65
    %v67 = vmul.f32 %v62, %v66
    %vm68 = vweird.f32 %v60
    %vm69 = vweird.f32 %v62
    %vm70 = vmor %vm68, %vm69
    %v71 = vsel %vm70, %v62, %v67
    %v72 = vrsqrt.pop %v61
    %v73 = vmul.f32 %v72, %v61
    %v74 = vmul.f32 %v73, %v72
    %v75 = vmul.f32 0.5, %v74
    %v76 = vsub.f32 1.5, %v75
    %v77 = vmul.f32 %v72, %v76
    %vm78 = vweird.f32 %v61
    %vm79 = vweird.f32 %v72
    %vm80 = vmor %vm78, %vm79
    %v81 = vsel %vm80, %v72, %v77
    %v82 = vmul.f32 %v48, %v71
    %v83 = vmul.f32 %v49, %v81
    %v85 = vperm.slane %v30, 0
    %v87 = vmul.f32 %v82, %v85
    %v88 = vmul.f32 %v83, %v85
    %v90 = vperm.slane %v31, 0
    %v92 = vadd.f32 %v87, %v90
    %v93 = vadd.f32 %v88, %v90
    %v94 = vpack.c.bf16 %v93, %v92
    %v95 = vld [vmem:[%s3] sm:$0xf]
    %v96 = vld [vmem:[%s3 + $0x4] sm:$0xf]
    %v97 = vld [vmem:[%s3 + $0x8] sm:$0xf]
    %v98 = vld [vmem:[%s3 + $0xc] sm:$0xf]
    %v99 = vld [vmem:[%s4] sm:$0x1]
    %v101 = vperm.slane %v99, 0
    %v107 = vunpack.c.l.b16 %v95
    %v108 = vunpack.c.l.b16 %v96
    %v109 = vunpack.c.l.b16 %v97
    %v110 = vunpack.c.l.b16 %v98
    %v111 = vpack.c.b16 %v108, %v107
    %v112 = vpack.c.b16 %v110, %v109
    %v116 = vsel %vm32, %v94, 0
    %118 = vmatpush.bf16.msra.mxu0 0
    %119 = vmatpush.bf16.msra.mxu0 0
    %120 = vmatpush.bf16.msra.mxu0 0
    %121 = vmatpush.bf16.msra.mxu0 0
    %122 = vmatpush.bf16.msra.mxu0 0
    %123 = vmatpush.bf16.msra.mxu0 0
    %124 = vmatpush.bf16.msra.mxu0 %v112
    %125 = vmatpush.bf16.msra.mxu0 %v111
    %126 = vmatmul.bf16.gmra.mxu0 %v116
    %v127 = vpop.f32.mrf.mxu0
    %v128 = vadd.f32 %v101, %v127
    %v129 = vpop.f32.mrf.mxu0
    %v130 = vadd.f32 %v101, %v129
    %131 = vdwg.mxu0
    %v132 = vmul.f32 %v128, 0.5
    %v133 = vmul.f32 %v130, 0.5
    %v134 = vmul.f32 %v128, 0.70710677
    %v135 = vmul.f32 %v130, 0.70710677
    %v136 = vmul.f32 %v134, %v134
    %v137 = vmin.f32 16.0, %v136
    %v138 = vmul.f32 %v137, 2.1237322e-06
    %v139 = vadd.f32 %v138, 0.00028619796
    %v140 = vmul.f32 %v137, %v139
    %v141 = vadd.f32 %v140, 0.0036580483
    %v142 = vmul.f32 %v137, %v141
    %v143 = vadd.f32 %v142, 0.05243302
    %v144 = vmul.f32 %v137, %v143
    %v145 = vadd.f32 %v144, 0.18741608
    %v146 = vmul.f32 %v137, %v145
    %v147 = vadd.f32 %v146, 1.1283791
    %v148 = vmul.f32 %v134, %v147
    %v149 = vmul.f32 %v137, 3.8918573e-05
    %v150 = vadd.f32 %v149, 0.001143296
    %v151 = vmul.f32 %v137, %v150
    %v152 = vadd.f32 %v151, 0.014752088
    %v153 = vmul.f32 %v137, %v152
    %v154 = vadd.f32 %v153, 0.112945676
    %v155 = vmul.f32 %v137, %v154
    %v156 = vadd.f32 %v155, 0.4994258
    %v157 = vmul.f32 %v137, %v156
    %v158 = vadd.f32 %v157, 1.0
    %v159 = vrcp.pop %v158
    %v160 = vmul.f32 %v158, %v159
    %v161 = vsub.f32 1.0, %v160
    %v162 = vmul.f32 %v159, %v161
    %v163 = vadd.f32 %v159, %v162
    %vm164 = vweird.f32 %v158
    %vm165 = vweird.f32 %v159
    %vm166 = vmor %vm164, %vm165
    %v167 = vsel %vm166, %v159, %v163
    %v168 = vand.u32 2147483647, %v158
    %vm169 = vcmp.eq.f32.partialorder %v168, 8.507059e+37
    %v170 = vand.u32 %v158, 2147483648
    %v171 = vor.u32 1.1754944e-38, %v170
    %v172 = vsel %vm169, %v171, %v167
    %v173 = vmul.f32 %v148, %v172
    %v174 = vmin.f32 %v173, 1.0
    %v175 = vmax.f32 %v174, -1.0
    %v176 = vmul.f32 %v135, %v135
    %v177 = vmin.f32 16.0, %v176
    %v178 = vmul.f32 %v177, 2.1237322e-06
    %v179 = vadd.f32 %v178, 0.00028619796
    %v180 = vmul.f32 %v177, %v179
    %v181 = vadd.f32 %v180, 0.0036580483
    %v182 = vmul.f32 %v177, %v181
    %v183 = vadd.f32 %v182, 0.05243302
    %v184 = vmul.f32 %v177, %v183
    %v185 = vadd.f32 %v184, 0.18741608
    %v186 = vmul.f32 %v177, %v185
    %v187 = vadd.f32 %v186, 1.1283791
    %v188 = vmul.f32 %v135, %v187
    %v189 = vmul.f32 %v177, 3.8918573e-05
    %v190 = vadd.f32 %v189, 0.001143296
    %v191 = vmul.f32 %v177, %v190
    %v192 = vadd.f32 %v191, 0.014752088
    %v193 = vmul.f32 %v177, %v192
    %v194 = vadd.f32 %v193, 0.112945676
    %v195 = vmul.f32 %v177, %v194
    %v196 = vadd.f32 %v195, 0.4994258
    %v197 = vmul.f32 %v177, %v196
    %v198 = vadd.f32 %v197, 1.0
    %v199 = vrcp.pop %v198
    %v200 = vmul.f32 %v198, %v199
    %v201 = vsub.f32 1.0, %v200
    %v202 = vmul.f32 %v199, %v201
    %v203 = vadd.f32 %v199, %v202
    %vm204 = vweird.f32 %v198
    %vm205 = vweird.f32 %v199
    %vm206 = vmor %vm204, %vm205
    %v207 = vsel %vm206, %v199, %v203
    %v208 = vand.u32 2147483647, %v198
    %vm209 = vcmp.eq.f32.partialorder %v208, 8.507059e+37
    %v210 = vand.u32 %v198, 2147483648
    %v211 = vor.u32 1.1754944e-38, %v210
    %v212 = vsel %vm209, %v211, %v207
    %v213 = vmul.f32 %v188, %v212
    %v214 = vmin.f32 %v213, 1.0
    %v215 = vmax.f32 %v214, -1.0
    %v216 = vadd.f32 %v175, 1.0
    %v217 = vadd.f32 %v215, 1.0
    %v218 = vmul.f32 %v132, %v216
    %v219 = vmul.f32 %v133, %v217
    %v220 = vpack.c.bf16 %v219, %v218
    %v221 = vld [vmem:[%s5] sm:$0xf]
    %v222 = vld [vmem:[%s5 + $0x4] sm:$0xf]
    %v223 = vld [vmem:[%s5 + $0x8] sm:$0xf]
    %v224 = vld [vmem:[%s5 + $0xc] sm:$0xf]
    %v225 = vld [vmem:[%s5 + $0x10] sm:$0xf]
    %v226 = vld [vmem:[%s5 + $0x14] sm:$0xf]
    %v227 = vld [vmem:[%s5 + $0x18] sm:$0xf]
    %v228 = vld [vmem:[%s5 + $0x1c] sm:$0xf]
    %v229 = vld [vmem:[%s5 + $0x20] sm:$0xf]
    %v230 = vld [vmem:[%s5 + $0x24] sm:$0xf]
    %v231 = vld [vmem:[%s5 + $0x28] sm:$0xf]
    %v232 = vld [vmem:[%s5 + $0x2c] sm:$0xf]
    %v233 = vld [vmem:[%s5 + $0x30] sm:$0xf]
    %v234 = vld [vmem:[%s5 + $0x34] sm:$0xf]
    %v235 = vld [vmem:[%s5 + $0x38] sm:$0xf]
    %v236 = vld [vmem:[%s5 + $0x3c] sm:$0xf]
    %v237 = vld [vmem:[%s6] sm:$0x1]
    %v239 = vperm.slane %v237, 0
    %v257 = vunpack.c.l.b16 %v221
    %v258 = vunpack.c.l.b16 %v222
    %v259 = vunpack.c.l.b16 %v223
    %v260 = vunpack.c.l.b16 %v224
    %v261 = vunpack.c.l.b16 %v225
    %v262 = vunpack.c.l.b16 %v226
    %v263 = vunpack.c.l.b16 %v227
    %v264 = vunpack.c.l.b16 %v228
    %v265 = vunpack.c.l.b16 %v229
    %v266 = vunpack.c.l.b16 %v230
    %v267 = vunpack.c.l.b16 %v231
    %v268 = vunpack.c.l.b16 %v232
    %v269 = vunpack.c.l.b16 %v233
    %v270 = vunpack.c.l.b16 %v234
    %v271 = vunpack.c.l.b16 %v235
    %v272 = vunpack.c.l.b16 %v236
    %v273 = vpack.c.b16 %v258, %v257
    %v274 = vpack.c.b16 %v260, %v259
    %v275 = vpack.c.b16 %v262, %v261
    %v276 = vpack.c.b16 %v264, %v263
    %v277 = vpack.c.b16 %v266, %v265
    %v278 = vpack.c.b16 %v268, %v267
    %v279 = vpack.c.b16 %v270, %v269
    %v280 = vpack.c.b16 %v272, %v271
    %289 = vmatpush.bf16.msra.mxu0 %v280
    %290 = vmatpush.bf16.msra.mxu0 %v279
    %291 = vmatpush.bf16.msra.mxu0 %v278
    %292 = vmatpush.bf16.msra.mxu0 %v277
    %293 = vmatpush.bf16.msra.mxu0 %v276
    %294 = vmatpush.bf16.msra.mxu0 %v275
    %295 = vmatpush.bf16.msra.mxu0 %v274
    %296 = vmatpush.bf16.msra.mxu0 %v273
    %297 = vmatmul.bf16.gmra.mxu0 %v220
    %v298 = vpop.f32.mrf.mxu0
    %v299 = vadd.f32 %v239, %v298
    %v300 = vpop.f32.mrf.mxu0
    %v301 = vadd.f32 %v239, %v300
    %302 = vdwg.mxu0
    %v303 = vadd.f32 %v28, %v299
    %v304 = vadd.f32 %v29, %v301
    %305 = vst.msk [vmem:[#allocation2] sm:$0xff] %vm32, %v303
    %306 = vst.msk [vmem:[#allocation2 + $0x8] sm:$0xff] %vm32, %v304
    // Predicated region
    $region30: #{block_forward.3} parent=1 // pred_check
      _
    $region31: #{block_forward.3} parent=1 // pred_check_branch
      %308 = sbr.rel (0) target = $region33
    $region32: #{block_forward.3} parent=1 // pred_region
      %310 = vsyncadd [#allocation3], 0
      %s311 = sshll.u32 [#allocation2], 4
      %s312 = int_to_ptr.vmem [resolvable:$true] %s311
      %s313 = sshll.u32 %s7, 4
      %s314 = int_to_ptr.hbm [resolvable:$true] %s313
      %319 = dma.vmem_to_hbm [thread:$0]  %s312, 256, %s314, [#allocation3], 128, 128, 8
    $region33: #{block_forward.3} parent=1 // pred_fallthru
      _
    // Predicated region
    $region34: #{block_forward.3} parent=1 // pred_check
      _
    $region35: #{block_forward.3} parent=1 // pred_check_branch
      %321 = sbr.rel (0) target = $region37
    $region36: #{block_forward.3} parent=1 // pred_region
      %323 = dma.done [#allocation3], 256
    $region37: #{block_forward.3} parent=1 // pred_fallthru
      _
    %324 = vsyncpa [#allocation3], 1

// kernel: block_forward.2
$region0: #{block_forward.2}
  #allocation0 [shape = 'u32[]', space=smem, size = 0x4, offset = 0x4, fixed_abs, tag = 'smem constant byte address 0x4 - core index']
  #allocation1 [shape = 'u32[72,128]{1,0:T(1,128)}', space=vmem, size = 0x9000, scoped, tag = 'internal scratch']
  %s0 = inlined_call_operand.hbm [shape: f32[2,8,32], index: 0, kind: input, shape index: {}]
  %s1 = inlined_call_operand.vmem [shape: f32[1,32], index: 1, kind: input, shape index: {}]
  %s2 = inlined_call_operand.hbm [shape: f32[1,32], index: 2, kind: input, shape index: {}]
  %s3 = inlined_call_operand.vmem [shape: bf16[32,96], index: 3, kind: input, shape index: {}]
  %s4 = inlined_call_operand.hbm [shape: bf16[32,32], index: 4, kind: input, shape index: {}]
  %s5 = inlined_call_operand.hbm [shape: f32[1,32], index: 5, kind: input, shape index: {}]
  %s6 = inlined_call_operand.vmem [shape: f32[2,8,32], index: 6, kind: output, shape index: {}]
  %s7 = sld [smem:[#allocation0]]
  $region73: #{block_forward.2} parent=0
    _
  %s9 = ssub.s32 1, %s7
  %s10 = scalar_select 0, %s9, %s7
  $region1: #{block_forward.2} parent=0
    #allocation2 [shape = 'u8[8192]{0}', space=vmem, size = 0x2000, scoped, tag = 'input window, operand 0']
    #allocation3 [shape = 's32[2]{0}', space=sflag, size = 0x8, scoped, tag = 'scoped memory for block_forward.2']
    #allocation4 [shape = 'u8[512]{0}', space=vmem, size = 0x400, scoped, tag = 'input window, operand 2, single buffered']
    #allocation5 [shape = 's32[1]{0}', space=sflag, size = 0x4, scoped, tag = 'scoped memory for block_forward.2']
    #allocation6 [shape = 'u8[8192]{0}', space=vmem, size = 0x2000, scoped, tag = 'input window, operand 4, single buffered']
    #allocation7 [shape = 'u8[512]{0}', space=vmem, size = 0x400, scoped, tag = 'input window, operand 5, single buffered']
    #allocation8 [shape = 's32[1]{0}', space=sflag, size = 0x4, scoped, tag = 'scoped memory for block_forward.2']
    %11 = vsyncpa [#allocation3], 0
    %s12 = scalar_lea.sflag [#allocation3], 1
    %13 = vsyncpa %s12, 0
    %14 = vsyncpa [#allocation5], 0
    %15 = vsyncpa [#allocation8], 0
    loop: start=0, step=1, limit=4
    $region2: #{block_forward.2} parent=1 // loop_pre_header
      _
    $region3: #{block_forward.2} parent=1 // loop_header
      %s17 = sphi 0, %s21
      %p18 = scmp.ge.s32.totalorder %s17, 4
      %s27 = sphi 0, %s29
      %s30 = sphi 0, %s27
      %s31 = sphi 0, %s30
      %s47 = sphi 0, %s31
      %s51 = sphi 0, %s51
      %s53 = sphi 0, %s51
      %s54 = sphi 0, %s53
      %s68 = sphi 0, %s54
      %s72 = sphi 0, %s72
      %s74 = sphi 0, %s72
      %s75 = sphi 0, %s74
      %s89 = sphi 0, %s75
      %s93 = sphi 0, %s93
      %s95 = sphi 0, %s93
      %s96 = sphi 0, %s95
      %s110 = sphi 0, %s96
      %s114 = sphi 0, %s114
      %s116 = sphi 0, %s114
      %s117 = sphi 0, %s116
      %s131 = sphi 0, %s117
      %s135 = sphi 0, %s135
      %s137 = sphi 0, %s135
      %s138 = sphi 0, %s137
      %s152 = sphi 0, %s138
      %s158 = sphi 0, %s160
      %s161 = sphi 0, %s158
      %s162 = sphi 0, %s161
      %s178 = sphi 0, %s162
    $region4: #{block_forward.2} parent=1 // loop_header_branch
      %20 = sbr.rel (%p18) target = $region8
    $region5: #{block_forward.2} parent=1 // loop_body
      %s22 = ssub.s32 %s17, 1
      %s23 = ssub.s32 %s17, 2
      %s24 = sadd.s32 %s17, 1
      %s25 = ssub.s32 %s17, %s24
      %p26 = scmp.eq.s32.totalorder %s25, 0
      %s28 = sadd.s32 %s27, 1
      %s29 = scalar_select %p26, %s27, %s28
      %p32 = pneg %p26
      %p33 = scmp.eq.s32.totalorder %s17, 1
      %p34 = por %p32, %p33
      %p35 = scmp.ne.s32.totalorder %s27, %s30
      %p36 = scmp.eq.s32.totalorder %s17, 0
      %p37 = por %p35, %p36
      %p38 = scmp.ne.s32.totalorder %s27, %s30
      %p39 = scmp.eq.s32.totalorder %s22, 1
      %p40 = por %p38, %p39
      %p41 = scmp.ne.s32.totalorder %s30, %s31
      %p42 = scmp.eq.s32.totalorder %s22, 0
      %p43 = por %p41, %p42
      %p44 = scmp.ne.s32.totalorder %s30, %s31
      %p45 = scmp.eq.s32.totalorder %s23, 1
      %p46 = por %p44, %p45
      %p48 = scmp.ne.s32.totalorder %s31, %s47
      %p49 = scmp.eq.s32.totalorder %s23, 0
      %p50 = por %p48, %p49
      %s52 = sadd.s32 %s51, 1
      %p55 = scmp.eq.s32.totalorder %s17, 1
      %p56 = scmp.ne.s32.totalorder %s51, %s53
      %p57 = scmp.eq.s32.totalorder %s17, 0
      %p58 = por %p56, %p57
      %p59 = scmp.ne.s32.totalorder %s51, %s53
      %p60 = scmp.eq.s32.totalorder %s22, 1
      %p61 = por %p59, %p60
      %p62 = scmp.ne.s32.totalorder %s53, %s54
      %p63 = scmp.eq.s32.totalorder %s22, 0
      %p64 = por %p62, %p63
      %p65 = scmp.ne.s32.totalorder %s53, %s54
      %p66 = scmp.eq.s32.totalorder %s23, 1
      %p67 = por %p65, %p66
      %p69 = scmp.ne.s32.totalorder %s54, %s68
      %p70 = scmp.eq.s32.totalorder %s23, 0
      %p71 = por %p69, %p70
      %s73 = sadd.s32 %s72, 1
      %p76 = scmp.eq.s32.totalorder %s17, 1
      %p77 = scmp.ne.s32.totalorder %s72, %s74
      %p78 = scmp.eq.s32.totalorder %s17, 0
      %p79 = por %p77, %p78
      %p80 = scmp.ne.s32.totalorder %s72, %s74
      %p81 = scmp.eq.s32.totalorder %s22, 1
      %p82 = por %p80, %p81
      %p83 = scmp.ne.s32.totalorder %s74, %s75
      %p84 = scmp.eq.s32.totalorder %s22, 0
      %p85 = por %p83, %p84
      %p86 = scmp.ne.s32.totalorder %s74, %s75
      %p87 = scmp.eq.s32.totalorder %s23, 1
      %p88 = por %p86, %p87
      %p90 = scmp.ne.s32.totalorder %s75, %s89
      %p91 = scmp.eq.s32.totalorder %s23, 0
      %p92 = por %p90, %p91
      %s94 = sadd.s32 %s93, 1
      %p97 = scmp.eq.s32.totalorder %s17, 1
      %p98 = scmp.ne.s32.totalorder %s93, %s95
      %p99 = scmp.eq.s32.totalorder %s17, 0
      %p100 = por %p98, %p99
      %p101 = scmp.ne.s32.totalorder %s93, %s95
      %p102 = scmp.eq.s32.totalorder %s22, 1
      %p103 = por %p101, %p102
      %p104 = scmp.ne.s32.totalorder %s95, %s96
      %p105 = scmp.eq.s32.totalorder %s22, 0
      %p106 = por %p104, %p105
      %p107 = scmp.ne.s32.totalorder %s95, %s96
      %p108 = scmp.eq.s32.totalorder %s23, 1
      %p109 = por %p107, %p108
      %p111 = scmp.ne.s32.totalorder %s96, %s110
      %p112 = scmp.eq.s32.totalorder %s23, 0
      %p113 = por %p111, %p112
      %s115 = sadd.s32 %s114, 1
      %p118 = scmp.eq.s32.totalorder %s17, 1
      %p119 = scmp.ne.s32.totalorder %s114, %s116
      %p120 = scmp.eq.s32.totalorder %s17, 0
      %p121 = por %p119, %p120
      %p122 = scmp.ne.s32.totalorder %s114, %s116
      %p123 = scmp.eq.s32.totalorder %s22, 1
      %p124 = por %p122, %p123
      %p125 = scmp.ne.s32.totalorder %s116, %s117
      %p126 = scmp.eq.s32.totalorder %s22, 0
      %p127 = por %p125, %p126
      %p128 = scmp.ne.s32.totalorder %s116, %s117
      %p129 = scmp.eq.s32.totalorder %s23, 1
      %p130 = por %p128, %p129
      %p132 = scmp.ne.s32.totalorder %s117, %s131
      %p133 = scmp.eq.s32.totalorder %s23, 0
      %p134 = por %p132, %p133
      %s136 = sadd.s32 %s135, 1
      %p139 = scmp.eq.s32.totalorder %s17, 1
      %p140 = scmp.ne.s32.totalorder %s135, %s137
      %p141 = scmp.eq.s32.totalorder %s17, 0
      %p142 = por %p140, %p141
      %p143 = scmp.ne.s32.totalorder %s135, %s137
      %p144 = scmp.eq.s32.totalorder %s22, 1
      %p145 = por %p143, %p144
      %p146 = scmp.ne.s32.totalorder %s137, %s138
      %p147 = scmp.eq.s32.totalorder %s22, 0
      %p148 = por %p146, %p147
      %p149 = scmp.ne.s32.totalorder %s137, %s138
      %p150 = scmp.eq.s32.totalorder %s23, 1
      %p151 = por %p149, %p150
      %p153 = scmp.ne.s32.totalorder %s138, %s152
      %p154 = scmp.eq.s32.totalorder %s23, 0
      %p155 = por %p153, %p154
      %s156 = ssub.s32 %s17, %s24
      %p157 = scmp.eq.s32.totalorder %s156, 0
      %s159 = sadd.s32 %s158, 1
      %s160 = scalar_select %p157, %s158, %s159
      %p163 = pneg %p157
      %p164 = scmp.eq.s32.totalorder %s17, 1
      %p165 = por %p163, %p164
      %p166 = scmp.ne.s32.totalorder %s158, %s161
      %p167 = scmp.eq.s32.totalorder %s17, 0
      %p168 = por %p166, %p167
      %p169 = scmp.ne.s32.totalorder %s158, %s161
      %p170 = scmp.eq.s32.totalorder %s22, 1
      %p171 = por %p169, %p170
      %p172 = scmp.ne.s32.totalorder %s161, %s162
      %p173 = scmp.eq.s32.totalorder %s22, 0
      %p174 = por %p172, %p173
      %p175 = scmp.ne.s32.totalorder %s161, %s162
      %p176 = scmp.eq.s32.totalorder %s23, 1
      %p177 = por %p175, %p176
      %p179 = scmp.ne.s32.totalorder %s162, %s178
      %p180 = scmp.eq.s32.totalorder %s23, 0
      %p181 = por %p179, %p180
      %p182 = scmp.le.s32.totalorder 1, %s17
      %p183 = scmp.lt.s32.totalorder %s17, 3
      %p184 = pnand %p182, %p183
      %p185 = pneg %p184
      // Predicated region
      $region9: #{block_forward.2} parent=5 // pred_check
        _
      $region10: #{block_forward.2} parent=5 // pred_check_branch
        %187 = sbr.rel (%p184) target = $region12
      $region11: #{block_forward.2} parent=5 // pred_region
        %s188 = ssub.s32 %s17, 1
        // Predicated region
        $region13: #{block_forward.2} parent=11 // pred_check
          %p189 = pneg %p64
        $region14: #{block_forward.2} parent=11 // pred_check_branch
          %191 = sbr.rel (%p189) target = $region16
        $region15: #{block_forward.2} parent=11 // pred_region
          _
        $region16: #{block_forward.2} parent=11 // pred_fallthru
          _
        // Predicated region
        $region17: #{block_forward.2} parent=11 // pred_check
          %p192 = pneg %p85
        $region18: #{block_forward.2} parent=11 // pred_check_branch
          %194 = sbr.rel (%p192) target = $region20
        $region19: #{block_forward.2} parent=11 // pred_region
          %196 = vsyncadd [#allocation5], 0
          %s198 = sshll.u32 %s2, 4
          %s199 = int_to_ptr.hbm [resolvable:$true] %s198
          %s200 = sshll.u32 [#allocation4], 4
          %s201 = int_to_ptr.vmem [resolvable:$true] %s200
          %203 = dma.hbm_to_vmem [thread:$0]  %s199, 16, %s201, [#allocation5]
        $region20: #{block_forward.2} parent=11 // pred_fallthru
          _
        // Predicated region
        $region21: #{block_forward.2} parent=11 // pred_check
          %p204 = pneg %p106
        $region22: #{block_forward.2} parent=11 // pred_check_branch
          %206 = sbr.rel (%p204) target = $region24
        $region23: #{block_forward.2} parent=11 // pred_region
          _
        $region24: #{block_forward.2} parent=11 // pred_fallthru
          _
        // Predicated region
        $region25: #{block_forward.2} parent=11 // pred_check
          %p207 = pneg %p127
        $region26: #{block_forward.2} parent=11 // pred_check_branch
          %209 = sbr.rel (%p207) target = $region28
        $region27: #{block_forward.2} parent=11 // pred_region
          %211 = vsyncadd [#allocation5], 0
          %s212 = sshll.u32 %s4, 4
          %s213 = int_to_ptr.hbm [resolvable:$true] %s212
          %s214 = sshll.u32 [#allocation6], 4
          %s215 = int_to_ptr.vmem [resolvable:$true] %s214
          %220 = dma.hbm_to_vmem [thread:$0]  %s213, 256, %s215, [#allocation5], 64, 64, 4
        $region28: #{block_forward.2} parent=11 // pred_fallthru
          _
        // Predicated region
        $region29: #{block_forward.2} parent=11 // pred_check
          %p221 = pneg %p148
        $region30: #{block_forward.2} parent=11 // pred_check_branch
          %223 = sbr.rel (%p221) target = $region32
        $region31: #{block_forward.2} parent=11 // pred_region
          %225 = vsyncadd [#allocation8], 0
          %s227 = sshll.u32 %s5, 4
          %s228 = int_to_ptr.hbm [resolvable:$true] %s227
          %s229 = sshll.u32 [#allocation7], 4
          %s230 = int_to_ptr.vmem [resolvable:$true] %s229
          %232 = dma.hbm_to_vmem [thread:$0]  %s228, 16, %s230, [#allocation8]
        $region32: #{block_forward.2} parent=11 // pred_fallthru
          _
      $region12: #{block_forward.2} parent=5 // pred_fallthru
        _
      %p233 = scmp.lt.s32.totalorder %s17, 2
      // Predicated region
      $region33: #{block_forward.2} parent=5 // pred_check
        %p234 = pneg %p233
      $region34: #{block_forward.2} parent=5 // pred_check_branch
        %236 = sbr.rel (%p234) target = $region36
      $region35: #{block_forward.2} parent=5 // pred_region
        // Predicated region
        $region37: #{block_forward.2} parent=35 // pred_check
          %p237 = pneg %p37
        $region38: #{block_forward.2} parent=35 // pred_check_branch
          %239 = sbr.rel (%p237) target = $region40
        $region39: #{block_forward.2} parent=35 // pred_region
          %s240 = sand.u32 %s27, 1
          %s241 = scalar_lea.sflag [#allocation3], %s240
          %s242 = sand.u32 %s27, 1
          %s243 = smul.addr %s242, 8
          %s244 = scalar_lea.vmem [#allocation2], %s243
          %246 = vsyncadd %s241, 0
          %s247 = smul.addr %s17, 8
          %s248 = scalar_lea.hbm %s0, %s247
          %s250 = sshll.u32 %s248, 4
          %s251 = int_to_ptr.hbm [resolvable:$true] %s250
          %s252 = sshll.u32 %s244, 4
          %s253 = int_to_ptr.vmem [resolvable:$true] %s252
          %255 = dma.hbm_to_vmem [thread:$0]  %s251, 128, %s253, %s241
        $region40: #{block_forward.2} parent=35 // pred_fallthru
          _
      $region36: #{block_forward.2} parent=5 // pred_fallthru
        _
      %p256 = scmp.le.s32.totalorder 1, %s17
      %p257 = scmp.lt.s32.totalorder %s17, 3
      %p258 = pnand %p256, %p257
      %p259 = pneg %p258
      // Predicated region
      $region41: #{block_forward.2} parent=5 // pred_check
        _
      $region42: #{block_forward.2} parent=5 // pred_check_branch
        %261 = sbr.rel (%p258) target = $region44
      $region43: #{block_forward.2} parent=5 // pred_region
        %s262 = ssub.s32 %s17, 1
        %s263 = sand.u32 %s30, 1
        %s264 = scalar_lea.sflag [#allocation3], %s263
        %s265 = sand.u32 %s30, 1
        %s266 = smul.addr %s265, 8
        %s267 = scalar_lea.vmem [#allocation2], %s266
        // Predicated region
        $region45: #{block_forward.2} parent=43 // pred_check
          %p268 = pneg %p43
        $region46: #{block_forward.2} parent=43 // pred_check_branch
          %270 = sbr.rel (%p268) target = $region48
        $region47: #{block_forward.2} parent=43 // pred_region
          %272 = dma.done %s264, 128
        $region48: #{block_forward.2} parent=43 // pred_fallthru
          _
        // Predicated region
        $region49: #{block_forward.2} parent=43 // pred_check
          %p273 = pneg %p85
        $region50: #{block_forward.2} parent=43 // pred_check_branch
          %275 = sbr.rel (%p273) target = $region52
        $region51: #{block_forward.2} parent=43 // pred_region
          %277 = dma.done [#allocation5], 16
        $region52: #{block_forward.2} parent=43 // pred_fallthru
          _
        // Predicated region
        $region53: #{block_forward.2} parent=43 // pred_check
          %p278 = pneg %p127
        $region54: #{block_forward.2} parent=43 // pred_check_branch
          %280 = sbr.rel (%p278) target = $region56
        $region55: #{block_forward.2} parent=43 // pred_region
          %282 = dma.done [#allocation5], 256
        $region56: #{block_forward.2} parent=43 // pred_fallthru
          _
        // Predicated region
        $region57: #{block_forward.2} parent=43 // pred_check
          %p283 = pneg %p148
        $region58: #{block_forward.2} parent=43 // pred_check_branch
          %285 = sbr.rel (%p283) target = $region60
        $region59: #{block_forward.2} parent=43 // pred_region
          %287 = dma.done [#allocation8], 16
        $region60: #{block_forward.2} parent=43 // pred_fallthru
          _
        %s288 = sand.u32 %s30, 1
        %s289 = scalar_lea.sflag [#allocation3], %s288
        %s290 = sand.u32 %s30, 1
        %s291 = smul.addr %s290, 8
        %s292 = scalar_lea.vmem [#allocation2], %s291
        %p293 = pneg %p43
        %p294 = pneg %p40
        %p295 = pneg %p64
        %p296 = pneg %p61
        %p297 = pneg %p85
        %p298 = pneg %p82
        %p299 = pneg %p106
        %p300 = pneg %p103
        %p301 = pneg %p127
        %p302 = pneg %p124
        %p303 = pneg %p148
        %p304 = pneg %p145
        %p305 = pneg %p174
        %p306 = pneg %p171
        %p307 = scmp.lt.s32.totalorder %s22, 1
        %s308 = scalar_select %p307, %s22, 1
        %s309 = smul.addr %s308, 8
        %s310 = scalar_lea.vmem %s6, %s309
        %p311 = scmp.lt.s32.totalorder %s22, 1
        %s312 = scalar_select %p311, %s22, 1
        %s313 = smul.addr %s312, 8
        %s314 = scalar_lea.vmem %s6, %s313
        %v316 = vld [vmem:[%s267] sm:$0xff]
        %v317 = vld [vmem:[%s1] sm:$0x1]
        %v318 = vld [vmem:[#allocation4] sm:$0x1]
        %vm319 = vcmask 261120
        %v320 = vsel %vm319, %v316, 0.0
        %321 = vadd.xlane.f32.xlu0 %v320
        %v322 = vpop.xlane.xlu0 %321
        %v323 = vrcp.pop 32.0
        %v324 = vmul.f32 32.0, %v323
        %v325 = vsub.f32 1.0, %v324
        %v326 = vmul.f32 %v323, %v325
        %v327 = vadd.f32 %v323, %v326
        %vm328 = vweird.f32 %v323
        %v329 = vsel %vm328, %v323, %v327
        %v330 = vmul.f32 %v322, %v329
        %v331 = vsub.f32 %v316, %v330
        %v332 = vmul.f32 %v331, %v331
        %v333 = vsel %vm319, %v332, 0.0
        %334 = vadd.xlane.f32.xlu0 %v333
        %v335 = vpop.xlane.xlu0 %334
        %v336 = vmul.f32 %v335, %v329
        %v337 = vadd.f32 %v336, 1e-05
        %v338 = vrsqrt.pop %v337
        %v339 = vmul.f32 %v338, %v337
        %v340 = vmul.f32 %v339, %v338
        %v341 = vmul.f32 0.5, %v340
        %v342 = vsub.f32 1.5, %v341
        %v343 = vmul.f32 %v338, %v342
        %vm344 = vweird.f32 %v337
        %vm345 = vweird.f32 %v338
        %vm346 = vmor %vm344, %vm345
        %v347 = vsel %vm346, %v338, %v343
        %v348 = vmul.f32 %v331, %v347
        %v350 = vperm.slane %v317, 0
        %v352 = vmul.f32 %v348, %v350
        %v354 = vperm.slane %v318, 0
        %v356 = vadd.f32 %v352, %v354
        %v357 = vpack.c.bf16 %v356, %v356
        %v358 = vld [vmem:[%s3] sm:$0xf]
        %v359 = vld [vmem:[%s3 + $0x4] sm:$0xf]
        %v360 = vld [vmem:[%s3 + $0x8] sm:$0xf]
        %v361 = vld [vmem:[%s3 + $0xc] sm:$0xf]
        %v366 = vunpack.c.l.b16 %v358
        %v367 = vunpack.c.l.b16 %v359
        %v368 = vunpack.c.l.b16 %v360
        %v369 = vunpack.c.l.b16 %v361
        %v370 = vpack.c.b16 %v367, %v366
        %v371 = vpack.c.b16 %v369, %v368
        %v375 = vsel %vm319, %v357, 0
        %377 = vmatpush.bf16.msra.mxu0 0
        %378 = vmatpush.bf16.msra.mxu0 0
        %379 = vmatpush.bf16.msra.mxu0 0
        %380 = vmatpush.bf16.msra.mxu0 0
        %381 = vmatpush.bf16.msra.mxu0 0
        %382 = vmatpush.bf16.msra.mxu0 0
        %383 = vmatpush.bf16.msra.mxu0 %v371
        %384 = vmatpush.bf16.msra.mxu0 %v370
        %385 = vmatmul.bf16.gmra.mxu0 %v375
        %v386 = vpop.f32.mrf.mxu0
        %v387 = vadd.f32 0.0, %v386
        %v388 = vpop.f32.mrf.mxu0
        %389 = vdwg.mxu0
        %v390 = vlaneseq
        %v391 = vshrl.u32 %v390, 7
        %v392 = vlaneseq
        %v393 = vand.u32 %v392, 127
        %vm394 = vcmp.le.s32.totalorder %v393, %v391
        %v395 = vpack.c.bf16 %v387, %v387
        %397 = vrot.lane.b32.xlu0 %v395, 96
        %v398 = vpop.permute.xlu0 %397
        %vm399 = vcmask 64512
        %v401 = vsel %vm399, %v395, 0
        %v404 = vsel %vm399, %v398, 0
        %406 = vmatpush.bf16.xpose.msra.mxu0 0
        %407 = vmatpush.bf16.xpose.msra.mxu0 0
        %408 = vmatpush.bf16.xpose.msra.mxu0 0
        %409 = vmatpush.bf16.xpose.msra.mxu0 0
        %410 = vmatpush.bf16.xpose.msra.mxu0 0
        %411 = vmatpush.bf16.xpose.msra.mxu0 0
        %412 = vmatpush.bf16.xpose.msra.mxu0 0
        %413 = vmatpush.bf16.xpose.msra.mxu0 %v404
        %414 = vmatmul.bf16.gmra.mxu0 %v401
        %v415 = vpop.f32.mrf.mxu0
        %v416 = vadd.f32 0.0, %v415
        %v417 = vpop.f32.mrf.mxu0
        %418 = vdwg.mxu0
        %v419 = vsel %vm394, %v416, -1e+30
        %v420 = vsel %vm399, %v419, -inf
        %421 = vmax.xlane.f32.xlu0 %v420
        %v422 = vpop.xlane.xlu0 %421
        %v423 = vsub.f32 %v419, %v422
        %v424 = vmul.f32 %v423, 1.442695
        %v425 = vpow.pop %v424
        %v426 = vsel %vm399, %v425, 0.0
        %427 = vadd.xlane.f32.xlu0 %v426
        %v428 = vpop.xlane.xlu0 %427
        %v429 = vrcp.pop %v428
        %v430 = vmul.f32 %v425, %v429
        %v431 = vpack.c.bf16 %v430, %v430
        %432 = vrot.lane.b32.xlu0 %v395, 64
        %v433 = vpop.permute.xlu0 %432
        %v435 = vsel %vm399, %v431, 0
        %vm437 = vcmask 1043456
        %v439 = vsel %vm437, %v433, 0
        %441 = vmatpush.bf16.msra.mxu0 0
        %442 = vmatpush.bf16.msra.mxu0 0
        %443 = vmatpush.bf16.msra.mxu0 0
        %444 = vmatpush.bf16.msra.mxu0 0
        %445 = vmatpush.bf16.msra.mxu0 0
        %446 = vmatpush.bf16.msra.mxu0 0
        %447 = vmatpush.bf16.msra.mxu0 0
        %448 = vmatpush.bf16.msra.mxu0 %v439
        %449 = vmatmul.bf16.gmra.mxu0 %v435
        %v450 = vpop.f32.mrf.mxu0
        %v451 = vadd.f32 0.0, %v450
        %v452 = vpop.f32.mrf.mxu0
        %453 = vdwg.mxu0
        %454 = vrot.lane.b32.xlu0 %v395, 120
        %v455 = vpop.permute.xlu0 %454
        %456 = vrot.lane.b32.xlu0 %v395, 88
        %v457 = vpop.permute.xlu0 %456
        %v459 = vsel %vm399, %v455, 0
        %v462 = vsel %vm399, %v457, 0
        %464 = vmatpush.bf16.xpose.msra.mxu0 0
        %465 = vmatpush.bf16.xpose.msra.mxu0 0
        %466 = vmatpush.bf16.xpose.msra.mxu0 0
        %467 = vmatpush.bf16.xpose.msra.mxu0 0
        %468 = vmatpush.bf16.xpose.msra.mxu0 0
        %469 = vmatpush.bf16.xpose.msra.mxu0 0
        %470 = vmatpush.bf16.xpose.msra.mxu0 0
        %471 = vmatpush.bf16.xpose.msra.mxu0 %v462
        %472 = vmatmul.bf16.gmra.mxu0 %v459
        %v473 = vpop.f32.mrf.mxu0
        %v474 = vadd.f32 0.0, %v473
        %v475 = vpop.f32.mrf.mxu0
        %476 = vdwg.mxu0
        %v477 = vsel %vm394, %v474, -1e+30
        %v478 = vsel %vm399, %v477, -inf
        %479 = vmax.xlane.f32.xlu0 %v478
        %v480 = vpop.xlane.xlu0 %479
        %v481 = vsub.f32 %v477, %v480
        %v482 = vmul.f32 %v481, 1.442695
        %v483 = vpow.pop %v482
        %v484 = vsel %vm399, %v483, 0.0
        %485 = vadd.xlane.f32.xlu0 %v484
        %v486 = vpop.xlane.xlu0 %485
        %v487 = vrcp.pop %v486
        %v488 = vmul.f32 %v483, %v487
        %v489 = vpack.c.bf16 %v488, %v488
        %490 = vrot.lane.b32.xlu0 %v395, 56
        %v491 = vpop.permute.xlu0 %490
        %v493 = vsel %vm399, %v489, 0
        %v496 = vsel %vm437, %v491, 0
        %498 = vmatpush.bf16.msra.mxu0 0
        %499 = vmatpush.bf16.msra.mxu0 0
        %500 = vmatpush.bf16.msra.mxu0 0
        %501 = vmatpush.bf16.msra.mxu0 0
        %502 = vmatpush.bf16.msra.mxu0 0
        %503 = vmatpush.bf16.msra.mxu0 0
        %504 = vmatpush.bf16.msra.mxu0 0
        %505 = vmatpush.bf16.msra.mxu0 %v496
        %506 = vmatmul.bf16.gmra.mxu0 %v493
        %v507 = vpop.f32.mrf.mxu0
        %v508 = vadd.f32 0.0, %v507
        %v509 = vpop.f32.mrf.mxu0
        %510 = vdwg.mxu0
        %511 = vrot.lane.b32.xlu0 %v395, 112
        %v512 = vpop.permute.xlu0 %511
        %513 = vrot.lane.b32.xlu0 %v395, 80
        %v514 = vpop.permute.xlu0 %513
        %v516 = vsel %vm399, %v512, 0
        %v519 = vsel %vm399, %v514, 0
        %521 = vmatpush.bf16.xpose.msra.mxu0 0
        %522 = vmatpush.bf16.xpose.msra.mxu0 0
        %523 = vmatpush.bf16.xpose.msra.mxu0 0
        %524 = vmatpush.bf16.xpose.msra.mxu0 0
        %525 = vmatpush.bf16.xpose.msra.mxu0 0
        %526 = vmatpush.bf16.xpose.msra.mxu0 0
        %527 = vmatpush.bf16.xpose.msra.mxu0 0
        %528 = vmatpush.bf16.xpose.msra.mxu0 %v519
        %529 = vmatmul.bf16.gmra.mxu0 %v516
        %v530 = vpop.f32.mrf.mxu0
        %v531 = vadd.f32 0.0, %v530
        %v532 = vpop.f32.mrf.mxu0
        %533 = vdwg.mxu0
        %v534 = vsel %vm394, %v531, -1e+30
        %v535 = vsel %vm399, %v534, -inf
        %536 = vmax.xlane.f32.xlu0 %v535
        %v537 = vpop.xlane.xlu0 %536
        %v538 = vsub.f32 %v534, %v537
        %v539 = vmul.f32 %v538, 1.442695
        %v540 = vpow.pop %v539
        %v541 = vsel %vm399, %v540, 0.0
        %542 = vadd.xlane.f32.xlu0 %v541
        %v543 = vpop.xlane.xlu0 %542
        %v544 = vrcp.pop %v543
        %v545 = vmul.f32 %v540, %v544
        %v546 = vpack.c.bf16 %v545, %v545
        %547 = vrot.lane.b32.xlu0 %v395, 48
        %v548 = vpop.permute.xlu0 %547
        %v550 = vsel %vm399, %v546, 0
        %v553 = vsel %vm437, %v548, 0
        %555 = vmatpush.bf16.msra.mxu0 0
        %556 = vmatpush.bf16.msra.mxu0 0
        %557 = vmatpush.bf16.msra.mxu0 0
        %558 = vmatpush.bf16.msra.mxu0 0
        %559 = vmatpush.bf16.msra.mxu0 0
        %560 = vmatpush.bf16.msra.mxu0 0
        %561 = vmatpush.bf16.msra.mxu0 0
        %562 = vmatpush.bf16.msra.mxu0 %v553
        %563 = vmatmul.bf16.gmra.mxu0 %v550
        %v564 = vpop.f32.mrf.mxu0
        %v565 = vadd.f32 0.0, %v564
        %v566 = vpop.f32.mrf.mxu0
        %567 = vdwg.mxu0
        %568 = vrot.lane.b32.xlu0 %v395, 104
        %v569 = vpop.permute.xlu0 %568
        %570 = vrot.lane.b32.xlu0 %v395, 72
        %v571 = vpop.permute.xlu0 %570
        %v573 = vsel %vm399, %v569, 0
        %v576 = vsel %vm399, %v571, 0
        %578 = vmatpush.bf16.xpose.msra.mxu0 0
        %579 = vmatpush.bf16.xpose.msra.mxu0 0
        %580 = vmatpush.bf16.xpose.msra.mxu0 0
        %581 = vmatpush.bf16.xpose.msra.mxu0 0
        %582 = vmatpush.bf16.xpose.msra.mxu0 0
        %583 = vmatpush.bf16.xpose.msra.mxu0 0
        %584 = vmatpush.bf16.xpose.msra.mxu0 0
        %585 = vmatpush.bf16.xpose.msra.mxu0 %v576
        %586 = vmatmul.bf16.gmra.mxu0 %v573
        %v587 = vpop.f32.mrf.mxu0
        %v588 = vadd.f32 0.0, %v587
        %v589 = vpop.f32.mrf.mxu0
        %590 = vdwg.mxu0
        %v591 = vsel %vm394, %v588, -1e+30
        %v592 = vsel %vm399, %v591, -inf
        %593 = vmax.xlane.f32.xlu0 %v592
        %v594 = vpop.xlane.xlu0 %593
        %v595 = vsub.f32 %v591, %v594
        %v596 = vmul.f32 %v595, 1.442695
        %v597 = vpow.pop %v596
        %v598 = vsel %vm399, %v597, 0.0
        %599 = vadd.xlane.f32.xlu0 %v598
        %v600 = vpop.xlane.xlu0 %599
        %v601 = vrcp.pop %v600
        %v602 = vmul.f32 %v597, %v601
        %v603 = vpack.c.bf16 %v602, %v602
        %604 = vrot.lane.b32.xlu0 %v395, 40
        %v605 = vpop.permute.xlu0 %604
        %v607 = vsel %vm399, %v603, 0
        %v610 = vsel %vm437, %v605, 0
        %612 = vmatpush.bf16.msra.mxu0 0
        %613 = vmatpush.bf16.msra.mxu0 0
        %614 = vmatpush.bf16.msra.mxu0 0
        %615 = vmatpush.bf16.msra.mxu0 0
        %616 = vmatpush.bf16.msra.mxu0 0
        %617 = vmatpush.bf16.msra.mxu0 0
        %618 = vmatpush.bf16.msra.mxu0 0
        %619 = vmatpush.bf16.msra.mxu0 %v610
        %620 = vmatmul.bf16.gmra.mxu0 %v607
        %v621 = vpop.f32.mrf.mxu0
        %v622 = vadd.f32 0.0, %v621
        %v623 = vpop.f32.mrf.mxu0
        %624 = vdwg.mxu0
        %626 = vrot.lane.b32.xlu0 %v508, 8
        %v627 = vpop.permute.xlu0 %626
        %630 = vrot.lane.b32.xlu0 %v565, 16
        %v631 = vpop.permute.xlu0 %630
        %634 = vrot.lane.b32.xlu0 %v622, 24
        %v635 = vpop.permute.xlu0 %634
        %v637 = vsel %vm399, %v451, %v627
        %vm638 = vcmask 130048
        %v639 = vsel %vm638, %v637, %v631
        %vm640 = vcmask 195584
        %v641 = vsel %vm640, %v639, %v635
        %v642 = vpack.c.bf16 %v641, %v641
        %v643 = vld [vmem:[#allocation6] sm:$0xf]
        %v644 = vld [vmem:[#allocation6 + $0x4] sm:$0xf]
        %v645 = vld [vmem:[#allocation6 + $0x8] sm:$0xf]
        %v646 = vld [vmem:[#allocation6 + $0xc] sm:$0xf]
        %v647 = vld [vmem:[#allocation7] sm:$0x1]
        %v649 = vperm.slane %v647, 0
        %v655 = vunpack.c.l.b16 %v643
        %v656 = vunpack.c.l.b16 %v644
        %v657 = vunpack.c.l.b16 %v645
        %v658 = vunpack.c.l.b16 %v646
        %v659 = vpack.c.b16 %v656, %v655
        %v660 = vpack.c.b16 %v658, %v657
        %v664 = vsel %vm319, %v642, 0
        %666 = vmatpush.bf16.msra.mxu0 0
        %667 = vmatpush.bf16.msra.mxu0 0
        %668 = vmatpush.bf16.msra.mxu0 0
        %669 = vmatpush.bf16.msra.mxu0 0
        %670 = vmatpush.bf16.msra.mxu0 0
        %671 = vmatpush.bf16.msra.mxu0 0
        %672 = vmatpush.bf16.msra.mxu0 %v660
        %673 = vmatpush.bf16.msra.mxu0 %v659
        %674 = vmatmul.bf16.gmra.mxu0 %v664
        %v675 = vpop.f32.mrf.mxu0
        %v676 = vadd.f32 %v649, %v675
        %v677 = vpop.f32.mrf.mxu0
        %678 = vdwg.mxu0
        %v679 = vadd.f32 %v316, %v676
        %680 = vst.msk [vmem:[%s314] sm:$0xff] %vm319, %v679
        %p681 = scmp.lt.s32.totalorder %s22, 1
        %s682 = scalar_select %p681, %s22, 1
        %s683 = smul.addr %s682, 8
        %s684 = scalar_lea.vmem %s6, %s683
        // Predicated region
        $region61: #{block_forward.2} parent=43 // pred_check
          %p685 = pneg %p171
        $region62: #{block_forward.2} parent=43 // pred_check_branch
          %687 = sbr.rel (%p685) target = $region64
        $region63: #{block_forward.2} parent=43 // pred_region
          _
        $region64: #{block_forward.2} parent=43 // pred_fallthru
          _
      $region44: #{block_forward.2} parent=5 // pred_fallthru
        _
      %p688 = scmp.le.s32.totalorder 2, %s17
      // Predicated region
      $region65: #{block_forward.2} parent=5 // pred_check
        %p689 = pneg %p688
      $region66: #{block_forward.2} parent=5 // pred_check_branch
        %691 = sbr.rel (%p689) target = $region68
      $region67: #{block_forward.2} parent=5 // pred_region
        %s692 = ssub.s32 %s17, 2
        // Predicated region
        $region69: #{block_forward.2} parent=67 // pred_check
          %p693 = pneg %p177
        $region70: #{block_forward.2} parent=67 // pred_check_branch
          %695 = sbr.rel (%p693) target = $region72
        $region71: #{block_forward.2} parent=67 // pred_region
          %p696 = scmp.lt.s32.totalorder %s23, 1
          %s697 = scalar_select %p696, %s23, 1
          %s698 = smul.addr %s697, 8
          %s699 = scalar_lea.vmem %s6, %s698
        $region72: #{block_forward.2} parent=67 // pred_fallthru
          _
      $region68: #{block_forward.2} parent=5 // pred_fallthru
        _
    $region6: #{block_forward.2} parent=1 // loop_footer
      %s21 = sadd.s32 1, %s17
    $region7: #{block_forward.2} parent=1 // loop_footer_branch
      %16 = sbr.rel target = $region3
    $region8: #{block_forward.2} parent=1 // loop_exit
      _
    %700 = vsyncpa [#allocation3], 1
    %s701 = scalar_lea.sflag [#allocation3], 1
    %702 = vsyncpa %s701, 1
    %703 = vsyncpa [#allocation5], 1
    %704 = vsyncpa [#allocation8], 1

</llo_original>
